<compile_context>
chip_gen: v7x
topology: tpu7x:2x2x1
jax: 0.10.0
libtpu: 0.0.40
codegen_flags: <defaults>
</compile_context>

<pallas_src>
import functools

import jax
import jax.numpy as jnp
from jax.experimental import pallas as pl
from jax.experimental.pallas import tpu as pltpu

VMEM_LIMIT_BYTES = 48 * 1024 * 1024  # above default scoped limit, still safe on v7x (64 MiB VMEM)


def _pick_tile(dim, target, mult):
    """Largest multiple of `mult` that divides `dim` and is <= target; else the full dim."""
    if dim <= target:
        return dim
    t = (target // mult) * mult
    while t >= mult:
        if dim % t == 0:
            return t
        t -= mult
    return dim


def _compiler_params(sem):
    return pltpu.CompilerParams(dimension_semantics=sem,
                                vmem_limit_bytes=VMEM_LIMIT_BYTES)


# --------------------------- kernel 1: fused Q/K/V projection ---------------------------

def _qkv_kernel(x_ref, wq_ref, wk_ref, wv_ref, bq_ref, bk_ref, bv_ref,
                q_ref, k_ref, v_ref, accq, acck, accv):
    ki = pl.program_id(3)

    @pl.when(ki == 0)
    def _init():
        accq[...] = jnp.zeros_like(accq)
        acck[...] = jnp.zeros_like(acck)
        accv[...] = jnp.zeros_like(accv)

    x = x_ref[0]                                           # (TS, TK) bf16
    accq[...] += jnp.dot(x, wq_ref[0], preferred_element_type=jnp.float32)
    acck[...] += jnp.dot(x, wk_ref[0], preferred_element_type=jnp.float32)
    accv[...] += jnp.dot(x, wv_ref[0], preferred_element_type=jnp.float32)

    @pl.when(ki == pl.num_programs(3) - 1)
    def _finalize():
        q_ref[0, 0] = (accq[...] + bq_ref[0]).astype(q_ref.dtype)
        k_ref[0, 0] = (acck[...] + bk_ref[0]).astype(k_ref.dtype)
        v_ref[0, 0] = (accv[...] + bv_ref[0]).astype(v_ref.dtype)


def qkv_projection(x, wq_r, wk_r, wv_r, bq_r, bk_r, bv_r, *, ts, tk):
    B, S, E = x.shape
    H, _, Dh = wq_r.shape
    grid = (B, H, S // ts, E // tk)

    x_spec = pl.BlockSpec((1, ts, tk), lambda b, h, si, ki: (b, si, ki))
    w_spec = pl.BlockSpec((1, tk, Dh), lambda b, h, si, ki: (h, ki, 0))
    b_spec = pl.BlockSpec((1, 1, Dh), lambda b, h, si, ki: (h, 0, 0))
    o_spec = pl.BlockSpec((1, 1, ts, Dh), lambda b, h, si, ki: (b, h, si, 0))
    out_sds = jax.ShapeDtypeStruct((B, H, S, Dh), x.dtype)

    return pl.pallas_call(
        _qkv_kernel,
        out_shape=(out_sds, out_sds, out_sds),
        grid_spec=pltpu.PrefetchScalarGridSpec(
            num_scalar_prefetch=0,
            grid=grid,
            in_specs=[x_spec, w_spec, w_spec, w_spec, b_spec, b_spec, b_spec],
            out_specs=(o_spec, o_spec, o_spec),
            scratch_shapes=[pltpu.VMEM((ts, Dh), jnp.float32) for _ in range(3)]),
        compiler_params=_compiler_params(("parallel", "parallel", "parallel", "arbitrary")),
    )(x, wq_r, wk_r, wv_r, bq_r, bk_r, bv_r)


# --------------------------- kernel 2: flash attention (no mask) ---------------------------

def _flash_kernel(q_ref, k_ref, v_ref, o_ref, m_sc, l_sc, acc_sc, *, scale):
    ki = pl.program_id(3)

    @pl.when(ki == 0)
    def _init():
        m_sc[...] = jnp.full_like(m_sc, -jnp.inf)
        l_sc[...] = jnp.zeros_like(l_sc)
        acc_sc[...] = jnp.zeros_like(acc_sc)

    q = q_ref[0, 0]                                        # (TQ,  Dh) bf16
    k = k_ref[0, 0]                                        # (TKV, Dh) bf16
    v = v_ref[0, 0]                                        # (TKV, Dh) bf16

    s = jax.lax.dot_general(q, k, (((1,), (1,)), ((), ())),
                            preferred_element_type=jnp.float32) * scale   # (TQ, TKV) f32

    m_prev = m_sc[...]
    m_new = jnp.maximum(m_prev, jnp.max(s, axis=-1, keepdims=True))
    alpha = jnp.exp(m_prev - m_new)
    p = jnp.exp(s - m_new)
    l_sc[...] = alpha * l_sc[...] + jnp.sum(p, axis=-1, keepdims=True)
    acc_sc[...] = alpha * acc_sc[...] + jnp.dot(p.astype(v.dtype), v,
                                                preferred_element_type=jnp.float32)
    m_sc[...] = m_new

    @pl.when(ki == pl.num_programs(3) - 1)
    def _finalize():
        inv_l = pl.reciprocal(l_sc[...], approx=True)
        o_ref[0, 0] = (acc_sc[...] * inv_l).astype(o_ref.dtype)


def flash_attention(q, k, v, *, tq, tkv):
    B, H, S, Dh = q.shape
    scale = 1.0 / (Dh ** 0.5)
    grid = (B, H, S // tq, S // tkv)

    q_spec = pl.BlockSpec((1, 1, tq, Dh), lambda b, h, qi, ki: (b, h, qi, 0))
    kv_spec = pl.BlockSpec((1, 1, tkv, Dh), lambda b, h, qi, ki: (b, h, ki, 0))
    o_spec = pl.BlockSpec((1, 1, tq, Dh), lambda b, h, qi, ki: (b, h, qi, 0))

    return pl.pallas_call(
        functools.partial(_flash_kernel, scale=scale),
        out_shape=jax.ShapeDtypeStruct((B, H, S, Dh), q.dtype),
        grid_spec=pltpu.PrefetchScalarGridSpec(
            num_scalar_prefetch=0,
            grid=grid,
            in_specs=[q_spec, kv_spec, kv_spec],
            out_specs=o_spec,
            scratch_shapes=[pltpu.VMEM((tq, 1), jnp.float32),
                            pltpu.VMEM((tq, 1), jnp.float32),
                            pltpu.VMEM((tq, Dh), jnp.float32)]),
        compiler_params=_compiler_params(("parallel", "parallel", "parallel", "arbitrary")),
    )(q, k, v)


# ------------------- kernel 3: output projection (head-merge folded into reduction) -------------------

def _out_proj_kernel(a_ref, w_ref, b_ref, o_ref, acc):
    h = pl.program_id(3)

    @pl.when(h == 0)
    def _init():
        acc[...] = jnp.zeros_like(acc)

    acc[...] += jnp.dot(a_ref[0, 0], w_ref[0], preferred_element_type=jnp.float32)

    @pl.when(h == pl.num_programs(3) - 1)
    def _finalize():
        o_ref[0] = (acc[...] + b_ref[...]).astype(o_ref.dtype)


def output_projection(attn, wo_r, bo, *, ts, tn, out_dtype):
    B, H, S, Dh = attn.shape
    E = wo_r.shape[-1]
    grid = (B, S // ts, E // tn, H)

    a_spec = pl.BlockSpec((1, 1, ts, Dh), lambda b, si, ni, h: (b, h, si, 0))
    w_spec = pl.BlockSpec((1, Dh, tn), lambda b, si, ni, h: (h, 0, ni))
    b_spec = pl.BlockSpec((1, tn), lambda b, si, ni, h: (0, ni))
    o_spec = pl.BlockSpec((1, ts, tn), lambda b, si, ni, h: (b, si, ni))

    return pl.pallas_call(
        _out_proj_kernel,
        out_shape=jax.ShapeDtypeStruct((B, S, E), out_dtype),
        grid_spec=pltpu.PrefetchScalarGridSpec(
            num_scalar_prefetch=0,
            grid=grid,
            in_specs=[a_spec, w_spec, b_spec],
            out_specs=o_spec,
            scratch_shapes=[pltpu.VMEM((ts, tn), jnp.float32)]),
        compiler_params=_compiler_params(("parallel", "parallel", "parallel", "arbitrary")),
    )(attn, wo_r, bo)


# ----------------------------------- model assembly -----------------------------------

def mhsa_forward(x, params, num_heads, *, compute_dtype=jnp.bfloat16):
    """Pallas forward of MultiHeadSelfAttention.  params weights stored (in, out): y = x @ W + b."""
    B, S, E = x.shape
    H = num_heads
    Dh = E // H
    cd = compute_dtype

    # One-time per-head weight layouts (parameter plumbing, not activation traffic).
    def per_head_in(w):   # (E, E) -> (H, E, Dh):  w_r[h, e, d] = w[e, h*Dh + d]
        return jnp.transpose(w.reshape(E, H, Dh), (1, 0, 2)).astype(cd)

    wq_r = per_head_in(params["wq"])
    wk_r = per_head_in(params["wk"])
    wv_r = per_head_in(params["wv"])
    bq_r = params["bq"].reshape(H, 1, Dh).astype(jnp.float32)
    bk_r = params["bk"].reshape(H, 1, Dh).astype(jnp.float32)
    bv_r = params["bv"].reshape(H, 1, Dh).astype(jnp.float32)
    wo_r = params["wo"].reshape(H, Dh, E).astype(cd)        # wo_r[h] = Wo[h*Dh:(h+1)*Dh, :]
    bo_r = params["bo"].reshape(1, E).astype(jnp.float32)

    x_c = x.astype(cd)

    ts = _pick_tile(S, 512, 8)        # row (sublane) tile
    tk = _pick_tile(E, 512, 128)      # contraction (lane) tile for input projections
    q, k, v = qkv_projection(x_c, wq_r, wk_r, wv_r, bq_r, bk_r, bv_r, ts=ts, tk=tk)

    tq = _pick_tile(S, 256, 8)
    tkv = _pick_tile(S, 512, 8)
    attn = flash_attention(q, k, v, tq=tq, tkv=tkv)

    tn = _pick_tile(E, 512, 128)
    out = output_projection(attn, wo_r, bo_r, ts=ts, tn=tn, out_dtype=x.dtype)
    return out


def mhsa_reference(x, params, num_heads):
    """Pure-JAX f32 reference mirroring the PyTorch module exactly."""
    B, S, E = x.shape
    H = num_heads
    Dh = E // H
    q = x @ params["wq"] + params["bq"]
    k = x @ params["wk"] + params["bk"]
    v = x @ params["wv"] + params["bv"]

    def split(t):
        return t.reshape(B, S, H, Dh).transpose(0, 2, 1, 3)

    qh, kh, vh = split(q), split(k), split(v)
    s = jnp.einsum("bhqd,bhkd->bhqk", qh, kh) / (Dh ** 0.5)
    p = jax.nn.softmax(s, axis=-1)
    o = jnp.einsum("bhqk,bhkd->bhqd", p, vh)
    o = o.transpose(0, 2, 1, 3).reshape(B, S, E)
    return o @ params["wo"] + params["bo"]


def init_params(key, embed_dim):
    def w(k, shape):
        return (0.02 * jax.random.normal(k, shape)).astype(jnp.float32)

    ks = jax.random.split(key, 8)
    # Weights stored as (in, out): y = x @ W + b  (== torch's x @ W_t.T + b)
    return {
        "wq": w(ks[0], (embed_dim, embed_dim)), "bq": w(ks[1], (embed_dim,)),
        "wk": w(ks[2], (embed_dim, embed_dim)), "bk": w(ks[3], (embed_dim,)),
        "wv": w(ks[4], (embed_dim, embed_dim)), "bv": w(ks[5], (embed_dim,)),
        "wo": w(ks[6], (embed_dim, embed_dim)), "bo": w(ks[7], (embed_dim,)),
    }


if __name__ == "__main__":
    B, S, E, H = 2, 8, 32, 4

    key = jax.random.PRNGKey(0)
    pkey, xkey = jax.random.split(key)
    params = init_params(pkey, E)
    x = jax.random.normal(xkey, (B, S, E), dtype=jnp.float32)

    fwd = jax.jit(functools.partial(mhsa_forward, num_heads=H))
    out = fwd(x, params)
    jax.block_until_ready(out)

    assert out.shape == (B, S, E), out.shape
    assert bool(jnp.all(jnp.isfinite(out)))

    ref = mhsa_reference(x, params, H)
    max_err = float(jnp.max(jnp.abs(out - ref)))
    assert max_err < 2e-3, f"max abs error vs f32 reference: {max_err}"
    print("KERNEL_OK")
</pallas_src>

<mosaic_0001>
module attributes {stable_mosaic.version = 11 : i64} {
  func.func @_qkv_kernel(%arg0: i32, %arg1: i32, %arg2: i32, %arg3: i32, %arg4: memref<1x8x32xbf16, #tpu.memory_space<vmem>>, %arg5: memref<1x32x8xbf16, #tpu.memory_space<vmem>>, %arg6: memref<1x32x8xbf16, #tpu.memory_space<vmem>>, %arg7: memref<1x32x8xbf16, #tpu.memory_space<vmem>>, %arg8: memref<1x1x8xf32, #tpu.memory_space<vmem>>, %arg9: memref<1x1x8xf32, #tpu.memory_space<vmem>>, %arg10: memref<1x1x8xf32, #tpu.memory_space<vmem>>, %arg11: memref<1x1x8x8xbf16, #tpu.memory_space<vmem>>, %arg12: memref<1x1x8x8xbf16, #tpu.memory_space<vmem>>, %arg13: memref<1x1x8x8xbf16, #tpu.memory_space<vmem>>, %arg14: memref<8x8xf32, #tpu.memory_space<vmem>>, %arg15: memref<8x8xf32, #tpu.memory_space<vmem>>, %arg16: memref<8x8xf32, #tpu.memory_space<vmem>>) attributes {dimension_semantics = [#tpu.dimension_semantics<parallel>, #tpu.dimension_semantics<parallel>, #tpu.dimension_semantics<parallel>, #tpu.dimension_semantics<arbitrary>], iteration_bounds = array<i64: 2, 4, 1, 1>, scalar_prefetch = 0 : i64, scratch_operands = 3 : i64, tpu.core_type = #tpu.core_type<tc>, window_params = [{transform_indices = @transform_0, window_bounds = array<i64: 1, 8, 32>}, {transform_indices = @transform_1, window_bounds = array<i64: 1, 32, 8>}, {transform_indices = @transform_2, window_bounds = array<i64: 1, 32, 8>}, {transform_indices = @transform_3, window_bounds = array<i64: 1, 32, 8>}, {transform_indices = @transform_4, window_bounds = array<i64: 1, 1, 8>}, {transform_indices = @transform_5, window_bounds = array<i64: 1, 1, 8>}, {transform_indices = @transform_6, window_bounds = array<i64: 1, 1, 8>}, {transform_indices = @transform_7, window_bounds = array<i64: 1, 1, 8, 8>}, {transform_indices = @transform_8, window_bounds = array<i64: 1, 1, 8, 8>}, {transform_indices = @transform_9, window_bounds = array<i64: 1, 1, 8, 8>}]} {
    %c0_i32 = arith.constant 0 : i32
    %0 = arith.cmpi eq, %arg3, %c0_i32 : i32
    %1 = arith.extui %0 : i1 to i32
    %c0_i32_0 = arith.constant 0 : i32
    %2 = arith.cmpi ne, %1, %c0_i32_0 : i32
    scf.if %2 {
      %cst_28 = arith.constant 0.000000e+00 : f32
      %26 = vector.broadcast %cst_28 : f32 to vector<8x8xf32>
      %c0_29 = arith.constant 0 : index
      %c0_30 = arith.constant 0 : index
      %27 = vector.load %arg14[%c0_29, %c0_30] : memref<8x8xf32, #tpu.memory_space<vmem>>, vector<8x8xf32>
      tpu.vector_store %arg14[%c0_29, %c0_30], %26 {strides = array<i32>} : memref<8x8xf32, #tpu.memory_space<vmem>>, vector<8x8xf32>,
      %cst_31 = arith.constant 0.000000e+00 : f32
      %28 = vector.broadcast %cst_31 : f32 to vector<8x8xf32>
      %c0_32 = arith.constant 0 : index
      %c0_33 = arith.constant 0 : index
      %29 = vector.load %arg15[%c0_32, %c0_33] : memref<8x8xf32, #tpu.memory_space<vmem>>, vector<8x8xf32>
      tpu.vector_store %arg15[%c0_32, %c0_33], %28 {strides = array<i32>} : memref<8x8xf32, #tpu.memory_space<vmem>>, vector<8x8xf32>,
      %cst_34 = arith.constant 0.000000e+00 : f32
      %30 = vector.broadcast %cst_34 : f32 to vector<8x8xf32>
      %c0_35 = arith.constant 0 : index
      %c0_36 = arith.constant 0 : index
      %31 = vector.load %arg16[%c0_35, %c0_36] : memref<8x8xf32, #tpu.memory_space<vmem>>, vector<8x8xf32>
      tpu.vector_store %arg16[%c0_35, %c0_36], %30 {strides = array<i32>} : memref<8x8xf32, #tpu.memory_space<vmem>>, vector<8x8xf32>,
    } else {
    }
    %c0 = arith.constant 0 : index
    %c0_1 = arith.constant 0 : index
    %c0_2 = arith.constant 0 : index
    %3 = vector.load %arg4[%c0, %c0_1, %c0_2] : memref<1x8x32xbf16, #tpu.memory_space<vmem>>, vector<1x8x32xbf16>
    %4 = vector.shape_cast %3 : vector<1x8x32xbf16> to vector<8x32xbf16>
    %c0_3 = arith.constant 0 : index
    %c0_4 = arith.constant 0 : index
    %5 = vector.load %arg14[%c0_3, %c0_4] : memref<8x8xf32, #tpu.memory_space<vmem>>, vector<8x8xf32>
    %c0_5 = arith.constant 0 : index
    %c0_6 = arith.constant 0 : index
    %c0_7 = arith.constant 0 : index
    %6 = vector.load %arg5[%c0_5, %c0_6, %c0_7] : memref<1x32x8xbf16, #tpu.memory_space<vmem>>, vector<1x32x8xbf16>
    %7 = vector.shape_cast %6 : vector<1x32x8xbf16> to vector<32x8xbf16>
    %cst = arith.constant dense<0.000000e+00> : vector<8x8xf32>
    %8 = tpu.matmul %4, %7, %cst {dimension_numbers = #tpu.dot_dimension_numbers<[1], [0], [0], [1], [0, 0, 1, 1], [], []>} : vector<8x32xbf16>, vector<32x8xbf16>, vector<8x8xf32> -> vector<8x8xf32>
    %9 = arith.addf %5, %8 : vector<8x8xf32>
    %c0_8 = arith.constant 0 : index
    %c0_9 = arith.constant 0 : index
    %10 = vector.load %arg14[%c0_8, %c0_9] : memref<8x8xf32, #tpu.memory_space<vmem>>, vector<8x8xf32>
    tpu.vector_store %arg14[%c0_8, %c0_9], %9 {strides = array<i32>} : memref<8x8xf32, #tpu.memory_space<vmem>>, vector<8x8xf32>,
    %c0_10 = arith.constant 0 : index
    %c0_11 = arith.constant 0 : index
    %11 = vector.load %arg15[%c0_10, %c0_11] : memref<8x8xf32, #tpu.memory_space<vmem>>, vector<8x8xf32>
    %c0_12 = arith.constant 0 : index
    %c0_13 = arith.constant 0 : index
    %c0_14 = arith.constant 0 : index
    %12 = vector.load %arg6[%c0_12, %c0_13, %c0_14] : memref<1x32x8xbf16, #tpu.memory_space<vmem>>, vector<1x32x8xbf16>
    %13 = vector.shape_cast %12 : vector<1x32x8xbf16> to vector<32x8xbf16>
    %cst_15 = arith.constant dense<0.000000e+00> : vector<8x8xf32>
    %14 = tpu.matmul %4, %13, %cst_15 {dimension_numbers = #tpu.dot_dimension_numbers<[1], [0], [0], [1], [0, 0, 1, 1], [], []>} : vector<8x32xbf16>, vector<32x8xbf16>, vector<8x8xf32> -> vector<8x8xf32>
    %15 = arith.addf %11, %14 : vector<8x8xf32>
    %c0_16 = arith.constant 0 : index
    %c0_17 = arith.constant 0 : index
    %16 = vector.load %arg15[%c0_16, %c0_17] : memref<8x8xf32, #tpu.memory_space<vmem>>, vector<8x8xf32>
    tpu.vector_store %arg15[%c0_16, %c0_17], %15 {strides = array<i32>} : memref<8x8xf32, #tpu.memory_space<vmem>>, vector<8x8xf32>,
    %c0_18 = arith.constant 0 : index
    %c0_19 = arith.constant 0 : index
    %17 = vector.load %arg16[%c0_18, %c0_19] : memref<8x8xf32, #tpu.memory_space<vmem>>, vector<8x8xf32>
    %c0_20 = arith.constant 0 : index
    %c0_21 = arith.constant 0 : index
    %c0_22 = arith.constant 0 : index
    %18 = vector.load %arg7[%c0_20, %c0_21, %c0_22] : memref<1x32x8xbf16, #tpu.memory_space<vmem>>, vector<1x32x8xbf16>
    %19 = vector.shape_cast %18 : vector<1x32x8xbf16> to vector<32x8xbf16>
    %cst_23 = arith.constant dense<0.000000e+00> : vector<8x8xf32>
    %20 = tpu.matmul %4, %19, %cst_23 {dimension_numbers = #tpu.dot_dimension_numbers<[1], [0], [0], [1], [0, 0, 1, 1], [], []>} : vector<8x32xbf16>, vector<32x8xbf16>, vector<8x8xf32> -> vector<8x8xf32>
    %21 = arith.addf %17, %20 : vector<8x8xf32>
    %c0_24 = arith.constant 0 : index
    %c0_25 = arith.constant 0 : index
    %22 = vector.load %arg16[%c0_24, %c0_25] : memref<8x8xf32, #tpu.memory_space<vmem>>, vector<8x8xf32>
    tpu.vector_store %arg16[%c0_24, %c0_25], %21 {strides = array<i32>} : memref<8x8xf32, #tpu.memory_space<vmem>>, vector<8x8xf32>,
    %c0_i32_26 = arith.constant 0 : i32
    %23 = arith.cmpi eq, %arg3, %c0_i32_26 : i32
    %24 = arith.extui %23 : i1 to i32
    %c0_i32_27 = arith.constant 0 : i32
    %25 = arith.cmpi ne, %24, %c0_i32_27 : i32
    scf.if %25 {
      %c0_28 = arith.constant 0 : index
      %c0_29 = arith.constant 0 : index
      %26 = vector.load %arg14[%c0_28, %c0_29] : memref<8x8xf32, #tpu.memory_space<vmem>>, vector<8x8xf32>
      %c0_30 = arith.constant 0 : index
      %c0_31 = arith.constant 0 : index
      %c0_32 = arith.constant 0 : index
      %27 = vector.load %arg8[%c0_30, %c0_31, %c0_32] : memref<1x1x8xf32, #tpu.memory_space<vmem>>, vector<1x1x8xf32>
      %28 = vector.shape_cast %27 : vector<1x1x8xf32> to vector<1x8xf32>
      %29 = vector.broadcast %28 : vector<1x8xf32> to vector<8x8xf32>
      %30 = arith.addf %26, %29 : vector<8x8xf32>
      %31 = arith.truncf %30 : vector<8x8xf32> to vector<8x8xbf16>
      %c0_33 = arith.constant 0 : index
      %c0_34 = arith.constant 0 : index
      %c0_35 = arith.constant 0 : index
      %c0_36 = arith.constant 0 : index
      %32 = vector.load %arg11[%c0_33, %c0_34, %c0_35, %c0_36] : memref<1x1x8x8xbf16, #tpu.memory_space<vmem>>, vector<1x1x8x8xbf16>
      %33 = vector.shape_cast %32 : vector<1x1x8x8xbf16> to vector<8x8xbf16>
      %34 = vector.shape_cast %31 : vector<8x8xbf16> to vector<1x1x8x8xbf16>
      tpu.vector_store %arg11[%c0_33, %c0_34, %c0_35, %c0_36], %34 {strides = array<i32>} : memref<1x1x8x8xbf16, #tpu.memory_space<vmem>>, vector<1x1x8x8xbf16>,
      %c0_37 = arith.constant 0 : index
      %c0_38 = arith.constant 0 : index
      %35 = vector.load %arg15[%c0_37, %c0_38] : memref<8x8xf32, #tpu.memory_space<vmem>>, vector<8x8xf32>
      %c0_39 = arith.constant 0 : index
      %c0_40 = arith.constant 0 : index
      %c0_41 = arith.constant 0 : index
      %36 = vector.load %arg9[%c0_39, %c0_40, %c0_41] : memref<1x1x8xf32, #tpu.memory_space<vmem>>, vector<1x1x8xf32>
      %37 = vector.shape_cast %36 : vector<1x1x8xf32> to vector<1x8xf32>
      %38 = vector.broadcast %37 : vector<1x8xf32> to vector<8x8xf32>
      %39 = arith.addf %35, %38 : vector<8x8xf32>
      %40 = arith.truncf %39 : vector<8x8xf32> to vector<8x8xbf16>
      %c0_42 = arith.constant 0 : index
      %c0_43 = arith.constant 0 : index
      %c0_44 = arith.constant 0 : index
      %c0_45 = arith.constant 0 : index
      %41 = vector.load %arg12[%c0_42, %c0_43, %c0_44, %c0_45] : memref<1x1x8x8xbf16, #tpu.memory_space<vmem>>, vector<1x1x8x8xbf16>
      %42 = vector.shape_cast %41 : vector<1x1x8x8xbf16> to vector<8x8xbf16>
      %43 = vector.shape_cast %40 : vector<8x8xbf16> to vector<1x1x8x8xbf16>
      tpu.vector_store %arg12[%c0_42, %c0_43, %c0_44, %c0_45], %43 {strides = array<i32>} : memref<1x1x8x8xbf16, #tpu.memory_space<vmem>>, vector<1x1x8x8xbf16>,
      %c0_46 = arith.constant 0 : index
      %c0_47 = arith.constant 0 : index
      %44 = vector.load %arg16[%c0_46, %c0_47] : memref<8x8xf32, #tpu.memory_space<vmem>>, vector<8x8xf32>
      %c0_48 = arith.constant 0 : index
      %c0_49 = arith.constant 0 : index
      %c0_50 = arith.constant 0 : index
      %45 = vector.load %arg10[%c0_48, %c0_49, %c0_50] : memref<1x1x8xf32, #tpu.memory_space<vmem>>, vector<1x1x8xf32>
      %46 = vector.shape_cast %45 : vector<1x1x8xf32> to vector<1x8xf32>
      %47 = vector.broadcast %46 : vector<1x8xf32> to vector<8x8xf32>
      %48 = arith.addf %44, %47 : vector<8x8xf32>
      %49 = arith.truncf %48 : vector<8x8xf32> to vector<8x8xbf16>
      %c0_51 = arith.constant 0 : index
      %c0_52 = arith.constant 0 : index
      %c0_53 = arith.constant 0 : index
      %c0_54 = arith.constant 0 : index
      %50 = vector.load %arg13[%c0_51, %c0_52, %c0_53, %c0_54] : memref<1x1x8x8xbf16, #tpu.memory_space<vmem>>, vector<1x1x8x8xbf16>
      %51 = vector.shape_cast %50 : vector<1x1x8x8xbf16> to vector<8x8xbf16>
      %52 = vector.shape_cast %49 : vector<8x8xbf16> to vector<1x1x8x8xbf16>
      tpu.vector_store %arg13[%c0_51, %c0_52, %c0_53, %c0_54], %52 {strides = array<i32>} : memref<1x1x8x8xbf16, #tpu.memory_space<vmem>>, vector<1x1x8x8xbf16>,
    } else {
    }
    return
  }
  func.func @transform_0(%arg0: i32, %arg1: i32, %arg2: i32, %arg3: i32) -> (i32, i32, i32) {
    %c0_i32 = arith.constant 0 : i32
    return %arg0, %arg2, %arg3 : i32, i32, i32
  }
  func.func @transform_1(%arg0: i32, %arg1: i32, %arg2: i32, %arg3: i32) -> (i32, i32, i32) {
    %c0_i32 = arith.constant 0 : i32
    %c0_i32_0 = arith.constant 0 : i32
    return %arg1, %arg3, %c0_i32 : i32, i32, i32
  }
  func.func @transform_2(%arg0: i32, %arg1: i32, %arg2: i32, %arg3: i32) -> (i32, i32, i32) {
    %c0_i32 = arith.constant 0 : i32
    %c0_i32_0 = arith.constant 0 : i32
    return %arg1, %arg3, %c0_i32 : i32, i32, i32
  }
  func.func @transform_3(%arg0: i32, %arg1: i32, %arg2: i32, %arg3: i32) -> (i32, i32, i32) {
    %c0_i32 = arith.constant 0 : i32
    %c0_i32_0 = arith.constant 0 : i32
    return %arg1, %arg3, %c0_i32 : i32, i32, i32
  }
  func.func @transform_4(%arg0: i32, %arg1: i32, %arg2: i32, %arg3: i32) -> (i32, i32, i32) {
    %c0_i32 = arith.constant 0 : i32
    %c0_i32_0 = arith.constant 0 : i32
    %c0_i32_1 = arith.constant 0 : i32
    return %arg1, %c0_i32, %c0_i32_0 : i32, i32, i32
  }
  func.func @transform_5(%arg0: i32, %arg1: i32, %arg2: i32, %arg3: i32) -> (i32, i32, i32) {
    %c0_i32 = arith.constant 0 : i32
    %c0_i32_0 = arith.constant 0 : i32
    %c0_i32_1 = arith.constant 0 : i32
    return %arg1, %c0_i32, %c0_i32_0 : i32, i32, i32
  }
  func.func @transform_6(%arg0: i32, %arg1: i32, %arg2: i32, %arg3: i32) -> (i32, i32, i32) {
    %c0_i32 = arith.constant 0 : i32
    %c0_i32_0 = arith.constant 0 : i32
    %c0_i32_1 = arith.constant 0 : i32
    return %arg1, %c0_i32, %c0_i32_0 : i32, i32, i32
  }
  func.func @transform_7(%arg0: i32, %arg1: i32, %arg2: i32, %arg3: i32) -> (i32, i32, i32, i32) {
    %c0_i32 = arith.constant 0 : i32
    %c0_i32_0 = arith.constant 0 : i32
    return %arg0, %arg1, %arg2, %c0_i32 : i32, i32, i32, i32
  }
  func.func @transform_8(%arg0: i32, %arg1: i32, %arg2: i32, %arg3: i32) -> (i32, i32, i32, i32) {
    %c0_i32 = arith.constant 0 : i32
    %c0_i32_0 = arith.constant 0 : i32
    return %arg0, %arg1, %arg2, %c0_i32 : i32, i32, i32, i32
  }
  func.func @transform_9(%arg0: i32, %arg1: i32, %arg2: i32, %arg3: i32) -> (i32, i32, i32, i32) {
    %c0_i32 = arith.constant 0 : i32
    %c0_i32_0 = arith.constant 0 : i32
    return %arg0, %arg1, %arg2, %c0_i32 : i32, i32, i32, i32
  }
}

module attributes {stable_mosaic.version = 11 : i64} {
  func.func @_out_proj_kernel(%arg0: i32, %arg1: i32, %arg2: i32, %arg3: i32, %arg4: memref<1x1x8x8xbf16, #tpu.memory_space<vmem>>, %arg5: memref<1x8x32xbf16, #tpu.memory_space<vmem>>, %arg6: memref<1x32xf32, #tpu.memory_space<vmem>>, %arg7: memref<1x8x32xf32, #tpu.memory_space<vmem>>, %arg8: memref<8x32xf32, #tpu.memory_space<vmem>>) attributes {dimension_semantics = [#tpu.dimension_semantics<parallel>, #tpu.dimension_semantics<parallel>, #tpu.dimension_semantics<parallel>, #tpu.dimension_semantics<arbitrary>], iteration_bounds = array<i64: 2, 1, 1, 4>, scalar_prefetch = 0 : i64, scratch_operands = 1 : i64, tpu.core_type = #tpu.core_type<tc>, window_params = [{transform_indices = @transform_0, window_bounds = array<i64: 1, 1, 8, 8>}, {transform_indices = @transform_1, window_bounds = array<i64: 1, 8, 32>}, {transform_indices = @transform_2, window_bounds = array<i64: 1, 32>}, {transform_indices = @transform_3, window_bounds = array<i64: 1, 8, 32>}]} {
    %c0_i32 = arith.constant 0 : i32
    %0 = arith.cmpi eq, %arg3, %c0_i32 : i32
    %1 = arith.extui %0 : i1 to i32
    %c0_i32_0 = arith.constant 0 : i32
    %2 = arith.cmpi ne, %1, %c0_i32_0 : i32
    scf.if %2 {
      %cst_12 = arith.constant 0.000000e+00 : f32
      %14 = vector.broadcast %cst_12 : f32 to vector<8x32xf32>
      %c0_13 = arith.constant 0 : index
      %c0_14 = arith.constant 0 : index
      %15 = vector.load %arg8[%c0_13, %c0_14] : memref<8x32xf32, #tpu.memory_space<vmem>>, vector<8x32xf32>
      tpu.vector_store %arg8[%c0_13, %c0_14], %14 {strides = array<i32>} : memref<8x32xf32, #tpu.memory_space<vmem>>, vector<8x32xf32>,
    } else {
    }
    %c0 = arith.constant 0 : index
    %c0_1 = arith.constant 0 : index
    %3 = vector.load %arg8[%c0, %c0_1] : memref<8x32xf32, #tpu.memory_space<vmem>>, vector<8x32xf32>
    %c0_2 = arith.constant 0 : index
    %c0_3 = arith.constant 0 : index
    %c0_4 = arith.constant 0 : index
    %c0_5 = arith.constant 0 : index
    %4 = vector.load %arg4[%c0_2, %c0_3, %c0_4, %c0_5] : memref<1x1x8x8xbf16, #tpu.memory_space<vmem>>, vector<1x1x8x8xbf16>
    %5 = vector.shape_cast %4 : vector<1x1x8x8xbf16> to vector<8x8xbf16>
    %c0_6 = arith.constant 0 : index
    %c0_7 = arith.constant 0 : index
    %c0_8 = arith.constant 0 : index
    %6 = vector.load %arg5[%c0_6, %c0_7, %c0_8] : memref<1x8x32xbf16, #tpu.memory_space<vmem>>, vector<1x8x32xbf16>
    %7 = vector.shape_cast %6 : vector<1x8x32xbf16> to vector<8x32xbf16>
    %cst = arith.constant dense<0.000000e+00> : vector<8x32xf32>
    %8 = tpu.matmul %5, %7, %cst {dimension_numbers = #tpu.dot_dimension_numbers<[1], [0], [0], [1], [0, 0, 1, 1], [], []>} : vector<8x8xbf16>, vector<8x32xbf16>, vector<8x32xf32> -> vector<8x32xf32>
    %9 = arith.addf %3, %8 : vector<8x32xf32>
    %c0_9 = arith.constant 0 : index
    %c0_10 = arith.constant 0 : index
    %10 = vector.load %arg8[%c0_9, %c0_10] : memref<8x32xf32, #tpu.memory_space<vmem>>, vector<8x32xf32>
    tpu.vector_store %arg8[%c0_9, %c0_10], %9 {strides = array<i32>} : memref<8x32xf32, #tpu.memory_space<vmem>>, vector<8x32xf32>,
    %c3_i32 = arith.constant 3 : i32
    %11 = arith.cmpi eq, %arg3, %c3_i32 : i32
    %12 = arith.extui %11 : i1 to i32
    %c0_i32_11 = arith.constant 0 : i32
    %13 = arith.cmpi ne, %12, %c0_i32_11 : i32
    scf.if %13 {
      %c0_12 = arith.constant 0 : index
      %c0_13 = arith.constant 0 : index
      %14 = vector.load %arg8[%c0_12, %c0_13] : memref<8x32xf32, #tpu.memory_space<vmem>>, vector<8x32xf32>
      %c0_14 = arith.constant 0 : index
      %c0_15 = arith.constant 0 : index
      %15 = vector.load %arg6[%c0_14, %c0_15] : memref<1x32xf32, #tpu.memory_space<vmem>>, vector<1x32xf32>
      %16 = vector.broadcast %15 : vector<1x32xf32> to vector<8x32xf32>
      %17 = arith.addf %14, %16 : vector<8x32xf32>
      %c0_16 = arith.constant 0 : index
      %c0_17 = arith.constant 0 : index
      %c0_18 = arith.constant 0 : index
      %18 = vector.load %arg7[%c0_16, %c0_17, %c0_18] : memref<1x8x32xf32, #tpu.memory_space<vmem>>, vector<1x8x32xf32>
      %19 = vector.shape_cast %18 : vector<1x8x32xf32> to vector<8x32xf32>
      %20 = vector.shape_cast %17 : vector<8x32xf32> to vector<1x8x32xf32>
      tpu.vector_store %arg7[%c0_16, %c0_17, %c0_18], %20 {strides = array<i32>} : memref<1x8x32xf32, #tpu.memory_space<vmem>>, vector<1x8x32xf32>,
    } else {
    }
    return
  }
  func.func @transform_0(%arg0: i32, %arg1: i32, %arg2: i32, %arg3: i32) -> (i32, i32, i32, i32) {
    %c0_i32 = arith.constant 0 : i32
    %c0_i32_0 = arith.constant 0 : i32
    return %arg0, %arg3, %arg1, %c0_i32 : i32, i32, i32, i32
  }
  func.func @transform_1(%arg0: i32, %arg1: i32, %arg2: i32, %arg3: i32) -> (i32, i32, i32) {
    %c0_i32 = arith.constant 0 : i32
    %c0_i32_0 = arith.constant 0 : i32
    return %arg3, %c0_i32, %arg2 : i32, i32, i32
  }
  func.func @transform_2(%arg0: i32, %arg1: i32, %arg2: i32, %arg3: i32) -> (i32, i32) {
    %c0_i32 = arith.constant 0 : i32
    %c0_i32_0 = arith.constant 0 : i32
    return %c0_i32, %arg2 : i32, i32
  }
  func.func @transform_3(%arg0: i32, %arg1: i32, %arg2: i32, %arg3: i32) -> (i32, i32, i32) {
    %c0_i32 = arith.constant 0 : i32
    return %arg0, %arg1, %arg2 : i32, i32, i32
  }
}

module attributes {stable_mosaic.version = 11 : i64} {
  func.func @_flash_kernel(%arg0: i32, %arg1: i32, %arg2: i32, %arg3: i32, %arg4: memref<1x1x8x8xbf16, #tpu.memory_space<vmem>>, %arg5: memref<1x1x8x8xbf16, #tpu.memory_space<vmem>>, %arg6: memref<1x1x8x8xbf16, #tpu.memory_space<vmem>>, %arg7: memref<1x1x8x8xbf16, #tpu.memory_space<vmem>>, %arg8: memref<8x1xf32, #tpu.memory_space<vmem>>, %arg9: memref<8x1xf32, #tpu.memory_space<vmem>>, %arg10: memref<8x8xf32, #tpu.memory_space<vmem>>) attributes {dimension_semantics = [#tpu.dimension_semantics<parallel>, #tpu.dimension_semantics<parallel>, #tpu.dimension_semantics<parallel>, #tpu.dimension_semantics<arbitrary>], iteration_bounds = array<i64: 2, 4, 1, 1>, scalar_prefetch = 0 : i64, scratch_operands = 3 : i64, tpu.core_type = #tpu.core_type<tc>, window_params = [{transform_indices = @transform_0, window_bounds = array<i64: 1, 1, 8, 8>}, {transform_indices = @transform_1, window_bounds = array<i64: 1, 1, 8, 8>}, {transform_indices = @transform_2, window_bounds = array<i64: 1, 1, 8, 8>}, {transform_indices = @transform_3, window_bounds = array<i64: 1, 1, 8, 8>}]} {
    %c0_i32 = arith.constant 0 : i32
    %0 = arith.cmpi eq, %arg3, %c0_i32 : i32
    %1 = arith.extui %0 : i1 to i32
    %c0_i32_0 = arith.constant 0 : i32
    %2 = arith.cmpi ne, %1, %c0_i32_0 : i32
    scf.if %2 {
      %cst_30 = arith.constant 0xFF800000 : f32
      %38 = vector.broadcast %cst_30 : f32 to vector<8x1xf32>
      %c0_31 = arith.constant 0 : index
      %c0_32 = arith.constant 0 : index
      %39 = vector.load %arg8[%c0_31, %c0_32] : memref<8x1xf32, #tpu.memory_space<vmem>>, vector<8x1xf32>
      tpu.vector_store %arg8[%c0_31, %c0_32], %38 {strides = array<i32>} : memref<8x1xf32, #tpu.memory_space<vmem>>, vector<8x1xf32>,
      %cst_33 = arith.constant 0.000000e+00 : f32
      %40 = vector.broadcast %cst_33 : f32 to vector<8x1xf32>
      %c0_34 = arith.constant 0 : index
      %c0_35 = arith.constant 0 : index
      %41 = vector.load %arg9[%c0_34, %c0_35] : memref<8x1xf32, #tpu.memory_space<vmem>>, vector<8x1xf32>
      tpu.vector_store %arg9[%c0_34, %c0_35], %40 {strides = array<i32>} : memref<8x1xf32, #tpu.memory_space<vmem>>, vector<8x1xf32>,
      %cst_36 = arith.constant 0.000000e+00 : f32
      %42 = vector.broadcast %cst_36 : f32 to vector<8x8xf32>
      %c0_37 = arith.constant 0 : index
      %c0_38 = arith.constant 0 : index
      %43 = vector.load %arg10[%c0_37, %c0_38] : memref<8x8xf32, #tpu.memory_space<vmem>>, vector<8x8xf32>
      tpu.vector_store %arg10[%c0_37, %c0_38], %42 {strides = array<i32>} : memref<8x8xf32, #tpu.memory_space<vmem>>, vector<8x8xf32>,
    } else {
    }
    %c0 = arith.constant 0 : index
    %c0_1 = arith.constant 0 : index
    %c0_2 = arith.constant 0 : index
    %c0_3 = arith.constant 0 : index
    %3 = vector.load %arg4[%c0, %c0_1, %c0_2, %c0_3] : memref<1x1x8x8xbf16, #tpu.memory_space<vmem>>, vector<1x1x8x8xbf16>
    %4 = vector.shape_cast %3 : vector<1x1x8x8xbf16> to vector<8x8xbf16>
    %c0_4 = arith.constant 0 : index
    %c0_5 = arith.constant 0 : index
    %c0_6 = arith.constant 0 : index
    %c0_7 = arith.constant 0 : index
    %5 = vector.load %arg5[%c0_4, %c0_5, %c0_6, %c0_7] : memref<1x1x8x8xbf16, #tpu.memory_space<vmem>>, vector<1x1x8x8xbf16>
    %6 = vector.shape_cast %5 : vector<1x1x8x8xbf16> to vector<8x8xbf16>
    %c0_8 = arith.constant 0 : index
    %c0_9 = arith.constant 0 : index
    %c0_10 = arith.constant 0 : index
    %c0_11 = arith.constant 0 : index
    %7 = vector.load %arg6[%c0_8, %c0_9, %c0_10, %c0_11] : memref<1x1x8x8xbf16, #tpu.memory_space<vmem>>, vector<1x1x8x8xbf16>
    %8 = vector.shape_cast %7 : vector<1x1x8x8xbf16> to vector<8x8xbf16>
    %cst = arith.constant dense<0.000000e+00> : vector<8x8xf32>
    %9 = tpu.matmul %4, %6, %cst {dimension_numbers = #tpu.dot_dimension_numbers<[1], [1], [0], [0], [0, 0, 1, 0], [], []>} : vector<8x8xbf16>, vector<8x8xbf16>, vector<8x8xf32> -> vector<8x8xf32>
    %cst_12 = arith.constant 0.353553385 : f32
    %10 = vector.broadcast %cst_12 : f32 to vector<8x8xf32>
    %11 = arith.mulf %9, %10 : vector<8x8xf32>
    %c0_13 = arith.constant 0 : index
    %c0_14 = arith.constant 0 : index
    %12 = vector.load %arg8[%c0_13, %c0_14] : memref<8x1xf32, #tpu.memory_space<vmem>>, vector<8x1xf32>
    %cst_15 = arith.constant dense<0xFF800000> : vector<8xf32>
    %13 = vector.multi_reduction <maximumf>, %11, %cst_15 [1] : vector<8x8xf32> to vector<8xf32>
    %14 = vector.shape_cast %13 : vector<8xf32> to vector<8x1xf32>
    %15 = arith.maximumf %12, %14 : vector<8x1xf32>
    %16 = arith.subf %12, %15 : vector<8x1xf32>
    %17 = math.exp %16 : vector<8x1xf32>
    %18 = vector.broadcast %15 : vector<8x1xf32> to vector<8x8xf32>
    %19 = arith.subf %11, %18 : vector<8x8xf32>
    %20 = math.exp %19 : vector<8x8xf32>
    %c0_16 = arith.constant 0 : index
    %c0_17 = arith.constant 0 : index
    %21 = vector.load %arg9[%c0_16, %c0_17] : memref<8x1xf32, #tpu.memory_space<vmem>>, vector<8x1xf32>
    %22 = arith.mulf %17, %21 : vector<8x1xf32>
    %cst_18 = arith.constant dense<0.000000e+00> : vector<8xf32>
    %23 = vector.multi_reduction <add>, %20, %cst_18 [1] : vector<8x8xf32> to vector<8xf32>
    %24 = vector.shape_cast %23 : vector<8xf32> to vector<8x1xf32>
    %25 = arith.addf %22, %24 : vector<8x1xf32>
    %c0_19 = arith.constant 0 : index
    %c0_20 = arith.constant 0 : index
    %26 = vector.load %arg9[%c0_19, %c0_20] : memref<8x1xf32, #tpu.memory_space<vmem>>, vector<8x1xf32>
    tpu.vector_store %arg9[%c0_19, %c0_20], %25 {strides = array<i32>} : memref<8x1xf32, #tpu.memory_space<vmem>>, vector<8x1xf32>,
    %c0_21 = arith.constant 0 : index
    %c0_22 = arith.constant 0 : index
    %27 = vector.load %arg10[%c0_21, %c0_22] : memref<8x8xf32, #tpu.memory_space<vmem>>, vector<8x8xf32>
    %28 = vector.broadcast %17 : vector<8x1xf32> to vector<8x8xf32>
    %29 = arith.mulf %28, %27 : vector<8x8xf32>
    %30 = arith.truncf %20 : vector<8x8xf32> to vector<8x8xbf16>
    %cst_23 = arith.constant dense<0.000000e+00> : vector<8x8xf32>
    %31 = tpu.matmul %30, %8, %cst_23 {dimension_numbers = #tpu.dot_dimension_numbers<[1], [0], [0], [1], [0, 0, 1, 1], [], []>} : vector<8x8xbf16>, vector<8x8xbf16>, vector<8x8xf32> -> vector<8x8xf32>
    %32 = arith.addf %29, %31 : vector<8x8xf32>
    %c0_24 = arith.constant 0 : index
    %c0_25 = arith.constant 0 : index
    %33 = vector.load %arg10[%c0_24, %c0_25] : memref<8x8xf32, #tpu.memory_space<vmem>>, vector<8x8xf32>
    tpu.vector_store %arg10[%c0_24, %c0_25], %32 {strides = array<i32>} : memref<8x8xf32, #tpu.memory_space<vmem>>, vector<8x8xf32>,
    %c0_26 = arith.constant 0 : index
    %c0_27 = arith.constant 0 : index
    %34 = vector.load %arg8[%c0_26, %c0_27] : memref<8x1xf32, #tpu.memory_space<vmem>>, vector<8x1xf32>
    tpu.vector_store %arg8[%c0_26, %c0_27], %15 {strides = array<i32>} : memref<8x1xf32, #tpu.memory_space<vmem>>, vector<8x1xf32>,
    %c0_i32_28 = arith.constant 0 : i32
    %35 = arith.cmpi eq, %arg3, %c0_i32_28 : i32
    %36 = arith.extui %35 : i1 to i32
    %c0_i32_29 = arith.constant 0 : i32
    %37 = arith.cmpi ne, %36, %c0_i32_29 : i32
    scf.if %37 {
      %c0_30 = arith.constant 0 : index
      %c0_31 = arith.constant 0 : index
      %38 = vector.load %arg9[%c0_30, %c0_31] : memref<8x1xf32, #tpu.memory_space<vmem>>, vector<8x1xf32>
      %39 = tpu.reciprocal %38 {approx = true} : vector<8x1xf32> -> vector<8x1xf32>
      %c0_32 = arith.constant 0 : index
      %c0_33 = arith.constant 0 : index
      %40 = vector.load %arg10[%c0_32, %c0_33] : memref<8x8xf32, #tpu.memory_space<vmem>>, vector<8x8xf32>
      %41 = vector.broadcast %39 : vector<8x1xf32> to vector<8x8xf32>
      %42 = arith.mulf %40, %41 : vector<8x8xf32>
      %43 = arith.truncf %42 : vector<8x8xf32> to vector<8x8xbf16>
      %c0_34 = arith.constant 0 : index
      %c0_35 = arith.constant 0 : index
      %c0_36 = arith.constant 0 : index
      %c0_37 = arith.constant 0 : index
      %44 = vector.load %arg7[%c0_34, %c0_35, %c0_36, %c0_37] : memref<1x1x8x8xbf16, #tpu.memory_space<vmem>>, vector<1x1x8x8xbf16>
      %45 = vector.shape_cast %44 : vector<1x1x8x8xbf16> to vector<8x8xbf16>
      %46 = vector.shape_cast %43 : vector<8x8xbf16> to vector<1x1x8x8xbf16>
      tpu.vector_store %arg7[%c0_34, %c0_35, %c0_36, %c0_37], %46 {strides = array<i32>} : memref<1x1x8x8xbf16, #tpu.memory_space<vmem>>, vector<1x1x8x8xbf16>,
    } else {
    }
    return
  }
  func.func @transform_0(%arg0: i32, %arg1: i32, %arg2: i32, %arg3: i32) -> (i32, i32, i32, i32) {
    %c0_i32 = arith.constant 0 : i32
    %c0_i32_0 = arith.constant 0 : i32
    return %arg0, %arg1, %arg2, %c0_i32 : i32, i32, i32, i32
  }
  func.func @transform_1(%arg0: i32, %arg1: i32, %arg2: i32, %arg3: i32) -> (i32, i32, i32, i32) {
    %c0_i32 = arith.constant 0 : i32
    %c0_i32_0 = arith.constant 0 : i32
    return %arg0, %arg1, %arg3, %c0_i32 : i32, i32, i32, i32
  }
  func.func @transform_2(%arg0: i32, %arg1: i32, %arg2: i32, %arg3: i32) -> (i32, i32, i32, i32) {
    %c0_i32 = arith.constant 0 : i32
    %c0_i32_0 = arith.constant 0 : i32
    return %arg0, %arg1, %arg3, %c0_i32 : i32, i32, i32, i32
  }
  func.func @transform_3(%arg0: i32, %arg1: i32, %arg2: i32, %arg3: i32) -> (i32, i32, i32, i32) {
    %c0_i32 = arith.constant 0 : i32
    %c0_i32_0 = arith.constant 0 : i32
    return %arg0, %arg1, %arg2, %c0_i32 : i32, i32, i32, i32
  }
}

</mosaic_0001>

<llo_original>
// kernel: mhsa_forward.5
$region0: #{mhsa_forward.5}
  #allocation0 [shape = 'u32[]', space=smem, size = 0x4, offset = 0x4, fixed_abs, tag = 'smem constant byte address 0x4 - core index']
  #allocation1 [shape = 'u32[144,128]{1,0:T(1,128)}', space=vmem, size = 0x12000, scoped, tag = 'internal scratch']
  #allocation2 [shape = 'f32[8,32]{1,0:T(8,128)}', space=vmem, size = 0x1000, scoped, tag = 'scratch operand']
  %s0 = inlined_call_operand.vmem [shape: bf16[2,4,8,8], index: 0, kind: input, shape index: {}]
  %s1 = inlined_call_operand.vmem [shape: bf16[4,8,32], index: 1, kind: input, shape index: {}]
  %s2 = inlined_call_operand.vmem [shape: f32[1,32], index: 2, kind: input, shape index: {}]
  %s3 = inlined_call_operand.hbm [shape: f32[2,8,32], index: 3, kind: output, shape index: {}]
  %s4 = sld [smem:[#allocation0]]
  $region53: #{mhsa_forward.5} parent=0
    _
  %s6 = ssub.s32 1, %s4
  %s7 = scalar_select 0, %s6, %s4
  $region1: #{mhsa_forward.5} parent=0
    #allocation3 [shape = 'u8[8192]{0}', space=vmem, size = 0x2000, scoped, tag = 'output window, operand 0']
    #allocation4 [shape = 's32[2]{0}', space=sflag, size = 0x8, scoped, tag = 'scoped memory for mhsa_forward.5']
    %8 = vsyncpa [#allocation4], 0
    %s9 = scalar_lea.sflag [#allocation4], 1
    %10 = vsyncpa %s9, 0
    loop: start=0, step=1, limit=10
    $region2: #{mhsa_forward.5} parent=1 // loop_pre_header
      _
    $region3: #{mhsa_forward.5} parent=1 // loop_header
      %s12 = sphi 0, %s16
      %p13 = scmp.ge.s32.totalorder %s12, 10
      %s19 = sphi 0, %s45
      %s20 = sphi 0, %s41
      %s21 = sphi 0, %s37
      %s22 = sphi 0, %s33
      %s23 = sphi 0, %s19
      %s24 = sphi 0, %s20
      %s25 = sphi 0, %s21
      %s26 = sphi 0, %s22
      %s27 = sphi 0, %s23
      %s28 = sphi 0, %s24
      %s29 = sphi 0, %s25
      %s30 = sphi 0, %s26
      %s52 = sphi 0, %s54
      %s55 = sphi 0, %s52
      %s56 = sphi 0, %s55
      %s72 = sphi 0, %s56
      %s80 = sphi 0, %s82
      %s83 = sphi 0, %s80
      %s84 = sphi 0, %s83
      %s100 = sphi 0, %s84
      %s106 = sphi 0, %s108
      %s109 = sphi 0, %s106
      %s110 = sphi 0, %s109
      %s126 = sphi 0, %s110
      %s136 = sphi 0, %s138
      %s139 = sphi 0, %s136
      %s140 = sphi 0, %s139
      %s156 = sphi 0, %s140
    $region4: #{mhsa_forward.5} parent=1 // loop_header_branch
      %15 = sbr.rel (%p13) target = $region8
    $region5: #{mhsa_forward.5} parent=1 // loop_body
      %s17 = ssub.s32 %s12, 1
      %s18 = ssub.s32 %s12, 2
      %s31 = sadd.s32 1, %s22
      %p32 = scmp.ge.s32.totalorder %s31, 4
      %s33 = scalar_select %p32, 0, %s31
      %s34 = sadd.s32 1, %s21
      %s35 = scalar_select %p32, %s34, %s21
      %p36 = scmp.ge.s32.totalorder %s35, 1
      %s37 = scalar_select %p36, 0, %s35
      %s38 = sadd.s32 1, %s20
      %s39 = scalar_select %p36, %s38, %s20
      %p40 = scmp.ge.s32.totalorder %s39, 1
      %s41 = scalar_select %p40, 0, %s39
      %s42 = sadd.s32 1, %s19
      %s43 = scalar_select %p40, %s42, %s19
      %p44 = scmp.ge.s32.totalorder %s43, 2
      %s45 = scalar_select %p44, 0, %s43
      %s46 = ssub.s32 %s19, %s45
      %s47 = ssub.s32 %s22, %s33
      %s48 = sor.u32 %s46, %s47
      %s49 = ssub.s32 %s20, %s41
      %s50 = sor.u32 %s48, %s49
      %p51 = scmp.eq.s32.totalorder %s50, 0
      %s53 = sadd.s32 %s52, 1
      %s54 = scalar_select %p51, %s52, %s53
      %p57 = pneg %p51
      %p58 = scmp.eq.s32.totalorder %s12, 7
      %p59 = por %p57, %p58
      %p60 = scmp.ne.s32.totalorder %s52, %s55
      %p61 = scmp.eq.s32.totalorder %s12, 0
      %p62 = por %p60, %p61
      %p63 = scmp.ne.s32.totalorder %s52, %s55
      %p64 = scmp.eq.s32.totalorder %s17, 7
      %p65 = por %p63, %p64
      %p66 = scmp.ne.s32.totalorder %s55, %s56
      %p67 = scmp.eq.s32.totalorder %s17, 0
      %p68 = por %p66, %p67
      %p69 = scmp.ne.s32.totalorder %s55, %s56
      %p70 = scmp.eq.s32.totalorder %s18, 7
      %p71 = por %p69, %p70
      %p73 = scmp.ne.s32.totalorder %s56, %s72
      %p74 = scmp.eq.s32.totalorder %s18, 0
      %p75 = por %p73, %p74
      %s76 = ssub.s32 %s22, %s33
      %s77 = ssub.s32 %s21, %s37
      %s78 = sor.u32 %s76, %s77
      %p79 = scmp.eq.s32.totalorder %s78, 0
      %s81 = sadd.s32 %s80, 1
      %s82 = scalar_select %p79, %s80, %s81
      %p85 = pneg %p79
      %p86 = scmp.eq.s32.totalorder %s12, 7
      %p87 = por %p85, %p86
      %p88 = scmp.ne.s32.totalorder %s80, %s83
      %p89 = scmp.eq.s32.totalorder %s12, 0
      %p90 = por %p88, %p89
      %p91 = scmp.ne.s32.totalorder %s80, %s83
      %p92 = scmp.eq.s32.totalorder %s17, 7
      %p93 = por %p91, %p92
      %p94 = scmp.ne.s32.totalorder %s83, %s84
      %p95 = scmp.eq.s32.totalorder %s17, 0
      %p96 = por %p94, %p95
      %p97 = scmp.ne.s32.totalorder %s83, %s84
      %p98 = scmp.eq.s32.totalorder %s18, 7
      %p99 = por %p97, %p98
      %p101 = scmp.ne.s32.totalorder %s84, %s100
      %p102 = scmp.eq.s32.totalorder %s18, 0
      %p103 = por %p101, %p102
      %s104 = ssub.s32 %s21, %s37
      %p105 = scmp.eq.s32.totalorder %s104, 0
      %s107 = sadd.s32 %s106, 1
      %s108 = scalar_select %p105, %s106, %s107
      %p111 = pneg %p105
      %p112 = scmp.eq.s32.totalorder %s12, 7
      %p113 = por %p111, %p112
      %p114 = scmp.ne.s32.totalorder %s106, %s109
      %p115 = scmp.eq.s32.totalorder %s12, 0
      %p116 = por %p114, %p115
      %p117 = scmp.ne.s32.totalorder %s106, %s109
      %p118 = scmp.eq.s32.totalorder %s17, 7
      %p119 = por %p117, %p118
      %p120 = scmp.ne.s32.totalorder %s109, %s110
      %p121 = scmp.eq.s32.totalorder %s17, 0
      %p122 = por %p120, %p121
      %p123 = scmp.ne.s32.totalorder %s109, %s110
      %p124 = scmp.eq.s32.totalorder %s18, 7
      %p125 = por %p123, %p124
      %p127 = scmp.ne.s32.totalorder %s110, %s126
      %p128 = scmp.eq.s32.totalorder %s18, 0
      %p129 = por %p127, %p128
      %s130 = ssub.s32 %s19, %s45
      %s131 = ssub.s32 %s20, %s41
      %s132 = sor.u32 %s130, %s131
      %s133 = ssub.s32 %s21, %s37
      %s134 = sor.u32 %s132, %s133
      %p135 = scmp.eq.s32.totalorder %s134, 0
      %s137 = sadd.s32 %s136, 1
      %s138 = scalar_select %p135, %s136, %s137
      %p141 = pneg %p135
      %p142 = scmp.eq.s32.totalorder %s12, 7
      %p143 = por %p141, %p142
      %p144 = scmp.ne.s32.totalorder %s136, %s139
      %p145 = scmp.eq.s32.totalorder %s12, 0
      %p146 = por %p144, %p145
      %p147 = scmp.ne.s32.totalorder %s136, %s139
      %p148 = scmp.eq.s32.totalorder %s17, 7
      %p149 = por %p147, %p148
      %p150 = scmp.ne.s32.totalorder %s139, %s140
      %p151 = scmp.eq.s32.totalorder %s17, 0
      %p152 = por %p150, %p151
      %p153 = scmp.ne.s32.totalorder %s139, %s140
      %p154 = scmp.eq.s32.totalorder %s18, 7
      %p155 = por %p153, %p154
      %p157 = scmp.ne.s32.totalorder %s140, %s156
      %p158 = scmp.eq.s32.totalorder %s18, 0
      %p159 = por %p157, %p158
      %p160 = scmp.le.s32.totalorder 1, %s12
      %p161 = scmp.lt.s32.totalorder %s12, 9
      %p162 = pnand %p160, %p161
      %p163 = pneg %p162
      // Predicated region
      $region9: #{mhsa_forward.5} parent=5 // pred_check
        _
      $region10: #{mhsa_forward.5} parent=5 // pred_check_branch
        %165 = sbr.rel (%p162) target = $region12
      $region11: #{mhsa_forward.5} parent=5 // pred_region
        %s166 = ssub.s32 %s12, 1
        // Predicated region
        $region13: #{mhsa_forward.5} parent=11 // pred_check
          %p167 = pneg %p122
        $region14: #{mhsa_forward.5} parent=11 // pred_check_branch
          %169 = sbr.rel (%p167) target = $region16
        $region15: #{mhsa_forward.5} parent=11 // pred_region
          %p170 = scmp.lt.s32.totalorder %s25, 0
          %s171 = scalar_select %p170, %s25, 0
          %s172 = scalar_lea.vmem %s2, %s171
        $region16: #{mhsa_forward.5} parent=11 // pred_fallthru
          _
      $region12: #{mhsa_forward.5} parent=5 // pred_fallthru
        _
      %p173 = scmp.lt.s32.totalorder %s12, 8
      // Predicated region
      $region17: #{mhsa_forward.5} parent=5 // pred_check
        %p174 = pneg %p173
      $region18: #{mhsa_forward.5} parent=5 // pred_check_branch
        %176 = sbr.rel (%p174) target = $region20
      $region19: #{mhsa_forward.5} parent=5 // pred_region
        // Predicated region
        $region21: #{mhsa_forward.5} parent=19 // pred_check
          %p177 = pneg %p62
        $region22: #{mhsa_forward.5} parent=19 // pred_check_branch
          %179 = sbr.rel (%p177) target = $region24
        $region23: #{mhsa_forward.5} parent=19 // pred_region
          %p180 = scmp.lt.s32.totalorder %s19, 1
          %s181 = scalar_select %p180, %s19, 1
          %p182 = scmp.lt.s32.totalorder %s22, 3
          %s183 = scalar_select %p182, %s22, 3
          %p184 = scmp.lt.s32.totalorder %s20, 0
          %s185 = scalar_select %p184, %s20, 0
          %s186 = sadd.s32 %s185, %s183
          %s187 = smul.addr %s181, 4
          %s188 = sadd.s32 %s186, %s187
          %s189 = smul.addr %s188, 4
          %s190 = scalar_lea.vmem %s0, %s189
        $region24: #{mhsa_forward.5} parent=19 // pred_fallthru
          _
        // Predicated region
        $region25: #{mhsa_forward.5} parent=19 // pred_check
          %p191 = pneg %p90
        $region26: #{mhsa_forward.5} parent=19 // pred_check_branch
          %193 = sbr.rel (%p191) target = $region28
        $region27: #{mhsa_forward.5} parent=19 // pred_region
          %p194 = scmp.lt.s32.totalorder %s22, 3
          %s195 = scalar_select %p194, %s22, 3
          %p196 = scmp.lt.s32.totalorder %s21, 0
          %s197 = scalar_select %p196, %s21, 0
          %s198 = sadd.s32 %s197, %s195
          %s199 = smul.addr %s198, 4
          %s200 = scalar_lea.vmem %s1, %s199
        $region28: #{mhsa_forward.5} parent=19 // pred_fallthru
          _
      $region20: #{mhsa_forward.5} parent=5 // pred_fallthru
        _
      %p201 = scmp.le.s32.totalorder 1, %s12
      %p202 = scmp.lt.s32.totalorder %s12, 9
      %p203 = pnand %p201, %p202
      %p204 = pneg %p203
      // Predicated region
      $region29: #{mhsa_forward.5} parent=5 // pred_check
        _
      $region30: #{mhsa_forward.5} parent=5 // pred_check_branch
        %206 = sbr.rel (%p203) target = $region32
      $region31: #{mhsa_forward.5} parent=5 // pred_region
        %s207 = ssub.s32 %s12, 1
        %p208 = scmp.lt.s32.totalorder %s23, 1
        %s209 = scalar_select %p208, %s23, 1
        %p210 = scmp.lt.s32.totalorder %s26, 3
        %s211 = scalar_select %p210, %s26, 3
        %p212 = scmp.lt.s32.totalorder %s24, 0
        %s213 = scalar_select %p212, %s24, 0
        %s214 = sadd.s32 %s213, %s211
        %s215 = smul.addr %s209, 4
        %s216 = sadd.s32 %s214, %s215
        %s217 = smul.addr %s216, 4
        %s218 = scalar_lea.vmem %s0, %s217
        %p219 = pneg %p68
        %p220 = pneg %p65
        %p221 = scmp.lt.s32.totalorder %s26, 3
        %s222 = scalar_select %p221, %s26, 3
        %p223 = scmp.lt.s32.totalorder %s25, 0
        %s224 = scalar_select %p223, %s25, 0
        %s225 = sadd.s32 %s224, %s222
        %s226 = smul.addr %s225, 4
        %s227 = scalar_lea.vmem %s1, %s226
        %p228 = pneg %p96
        %p229 = pneg %p93
        %p230 = scmp.lt.s32.totalorder %s25, 0
        %s231 = scalar_select %p230, %s25, 0
        %s232 = scalar_lea.vmem %s2, %s231
        %p233 = pneg %p122
        %p234 = pneg %p119
        %p235 = pneg %p152
        %p236 = pneg %p149
        %s237 = sand.u32 %s139, 1
        %s238 = scalar_lea.sflag [#allocation4], %s237
        %s239 = sand.u32 %s139, 1
        %s240 = smul.addr %s239, 8
        %s241 = scalar_lea.vmem [#allocation3], %s240
        %p242 = scmp.lt.s32.totalorder %s23, 1
        %s243 = scalar_select %p242, %s23, 1
        %p244 = scmp.lt.s32.totalorder %s26, 3
        %s245 = scalar_select %p244, %s26, 3
        %p246 = scmp.lt.s32.totalorder %s24, 0
        %s247 = scalar_select %p246, %s24, 0
        %s248 = sadd.s32 %s247, %s245
        %s249 = smul.addr %s243, 4
        %s250 = sadd.s32 %s248, %s249
        %s251 = smul.addr %s250, 4
        %s252 = scalar_lea.vmem %s0, %s251
        %p253 = scmp.lt.s32.totalorder %s26, 3
        %s254 = scalar_select %p253, %s26, 3
        %p255 = scmp.lt.s32.totalorder %s25, 0
        %s256 = scalar_select %p255, %s25, 0
        %s257 = sadd.s32 %s256, %s254
        %s258 = smul.addr %s257, 4
        %s259 = scalar_lea.vmem %s1, %s258
        %p260 = scmp.lt.s32.totalorder %s25, 0
        %s261 = scalar_select %p260, %s25, 0
        %s262 = scalar_lea.vmem %s2, %s261
        %p264 = scmp.eq.s32.totalorder %s26, 0
        // Predicated region
        $region33: #{mhsa_forward.5} parent=31 // pred_check
          %p265 = pneg %p264
        $region34: #{mhsa_forward.5} parent=31 // pred_check_branch
          %267 = sbr.rel (%p265) target = $region36
        $region35: #{mhsa_forward.5} parent=31 // pred_region
          %vm268 = vcmask 261120
          %269 = vst.msk [vmem:[#allocation2] sm:$0xff] %vm268, 0.0
        $region36: #{mhsa_forward.5} parent=31 // pred_fallthru
          _
        %v270 = vld [vmem:[#allocation2] sm:$0xff]
        %v271 = vld [vmem:[%s252] sm:$0xf]
        %v272 = vld [vmem:[%s259] sm:$0xf]
        %vm273 = vcmask 64512
        %v275 = vsel %vm273, %v271, 0
        %vm277 = vcmask 1043456
        %v279 = vsel %vm277, %v272, 0
        %281 = vmatprep.subr.bf16.mxu0 0
        %282 = vmatpush1.bf16.msra.mxu0 %v279
        %283 = vmatprep.subr.bf16.mxu0 0
        %284 = vmatpush1.bf16.msra.mxu0 0
        %285 = vmatprep.subr.bf16.mxu0 0
        %286 = vmatpush1.bf16.msra.mxu0 0
        %287 = vmatprep.subr.bf16.mxu0 0
        %288 = vmatpush1.bf16.msra.mxu0 0
        %289 = vmatprep.subr.bf16.mxu0 0
        %290 = vmatpush1.bf16.msra.mxu0 0
        %291 = vmatprep.subr.bf16.mxu0 0
        %292 = vmatpush1.bf16.msra.mxu0 0
        %293 = vmatprep.subr.bf16.mxu0 0
        %294 = vmatpush1.bf16.msra.mxu0 0
        %295 = vmatprep.subr.bf16.mxu0 0
        %296 = vmatpush1.bf16.msra.mxu0 0
        %297 = vmatprep.subr.bf16.mxu0 0
        %298 = vmatpush1.bf16.msra.mxu0 0
        %299 = vmatprep.subr.bf16.mxu0 0
        %300 = vmatpush1.bf16.msra.mxu0 0
        %301 = vmatprep.subr.bf16.mxu0 0
        %302 = vmatpush1.bf16.msra.mxu0 0
        %303 = vmatprep.subr.bf16.mxu0 0
        %304 = vmatpush1.bf16.msra.mxu0 0
        %305 = vmatprep.subr.bf16.mxu0 0
        %306 = vmatpush1.bf16.msra.mxu0 0
        %307 = vmatprep.subr.bf16.mxu0 0
        %308 = vmatpush1.bf16.msra.mxu0 0
        %309 = vmatprep.subr.bf16.mxu0 0
        %310 = vmatpush1.bf16.msra.mxu0 0
        %311 = vmatprep.subr.bf16.mxu0 0
        %312 = vmatpush1.bf16.msra.mxu0 0
        %313 = vmatprep.mubr.bf16.mxu0 0
        %314 = vmatmul.mubr.bf16.gmra.mrb[0].mxu0 %v275
        %v315 = vpop.f32.mrb[0].mxu0
        %v316 = vadd.f32 0.0, %v315
        %v317 = vpop.f32.mrb[0].mxu0
        %v318 = vpop.f32.mrb[0].mxu0
        %v319 = vpop.f32.mrb[0].mxu0
        %320 = vdwg.mxu0
        %v321 = vadd.f32 %v270, %v316
        %vm322 = vcmask 261120
        %323 = vst.msk [vmem:[#allocation2] sm:$0xff] %vm322, %v321
        %p324 = scmp.eq.s32.totalorder %s26, 3
        // Predicated region
        $region37: #{mhsa_forward.5} parent=31 // pred_check
          %p325 = pneg %p324
        $region38: #{mhsa_forward.5} parent=31 // pred_check_branch
          %327 = sbr.rel (%p325) target = $region40
        $region39: #{mhsa_forward.5} parent=31 // pred_region
          %v328 = vld [vmem:[#allocation2] sm:$0xff]
          %v329 = vld [vmem:[%s262] sm:$0x1]
          %v331 = vlaneseq
          %v332 = vshrl.u32 %v331, 7
          %v333 = vsub.s32 0, %v332
          %v334 = vrot.slane %v329, %v333
          %v336 = vadd.f32 %v328, %v334
          %337 = vst.msk [vmem:[%s241] sm:$0xff] %vm322, %v336
        $region40: #{mhsa_forward.5} parent=31 // pred_fallthru
          _
        %s338 = sand.u32 %s139, 1
        %s339 = scalar_lea.sflag [#allocation4], %s338
        %s340 = sand.u32 %s139, 1
        %s341 = smul.addr %s340, 8
        %s342 = scalar_lea.vmem [#allocation3], %s341
        // Predicated region
        $region41: #{mhsa_forward.5} parent=31 // pred_check
          %p343 = pneg %p149
        $region42: #{mhsa_forward.5} parent=31 // pred_check_branch
          %345 = sbr.rel (%p343) target = $region44
        $region43: #{mhsa_forward.5} parent=31 // pred_region
          %s347 = ssub.s32 128, 128
          %348 = vsyncadd %s339, %s347
          %s349 = sadd.s32 %s25, %s24
          %s350 = sadd.s32 %s349, %s23
          %s351 = smul.addr %s350, 128
          %s352 = scalar_lea.hbm %s3, %s351
          %s354 = sshll.u32 %s342, 4
          %s355 = int_to_ptr.vmem [resolvable:$true] %s354
          %357 = dma.vmem_to_hbm [thread:$0]  %s355, 128, %s352, %s339
        $region44: #{mhsa_forward.5} parent=31 // pred_fallthru
          _
      $region32: #{mhsa_forward.5} parent=5 // pred_fallthru
        _
      %p358 = scmp.le.s32.totalorder 2, %s12
      // Predicated region
      $region45: #{mhsa_forward.5} parent=5 // pred_check
        %p359 = pneg %p358
      $region46: #{mhsa_forward.5} parent=5 // pred_check_branch
        %361 = sbr.rel (%p359) target = $region48
      $region47: #{mhsa_forward.5} parent=5 // pred_region
        %s362 = ssub.s32 %s12, 2
        // Predicated region
        $region49: #{mhsa_forward.5} parent=47 // pred_check
          %p363 = pneg %p155
        $region50: #{mhsa_forward.5} parent=47 // pred_check_branch
          %365 = sbr.rel (%p363) target = $region52
        $region51: #{mhsa_forward.5} parent=47 // pred_region
          %s366 = sand.u32 %s140, 1
          %s367 = scalar_lea.sflag [#allocation4], %s366
          %s368 = sand.u32 %s140, 1
          %s369 = smul.addr %s368, 8
          %s370 = scalar_lea.vmem [#allocation3], %s369
          %371 = dma.done %s367, 128
        $region52: #{mhsa_forward.5} parent=47 // pred_fallthru
          _
      $region48: #{mhsa_forward.5} parent=5 // pred_fallthru
        _
    $region6: #{mhsa_forward.5} parent=1 // loop_footer
      %s16 = sadd.s32 1, %s12
    $region7: #{mhsa_forward.5} parent=1 // loop_footer_branch
      %11 = sbr.rel target = $region3
    $region8: #{mhsa_forward.5} parent=1 // loop_exit
      _
    %372 = vsyncpa [#allocation4], 1
    %s373 = scalar_lea.sflag [#allocation4], 1
    %374 = vsyncpa %s373, 1

// kernel: mhsa_forward.3
$region0: #{mhsa_forward.3}
  #allocation0 [shape = 'u32[]', space=smem, size = 0x4, offset = 0x4, fixed_abs, tag = 'smem constant byte address 0x4 - core index']
  #allocation1 [shape = 'u32[144,128]{1,0:T(1,128)}', space=vmem, size = 0x12000, scoped, tag = 'internal scratch']
  #allocation2 [shape = 'f32[8,8]{1,0:T(8,128)}', space=vmem, size = 0x1000, scoped, tag = 'scratch operand']
  #allocation3 [shape = 'f32[8,8]{1,0:T(8,128)}', space=vmem, size = 0x1000, scoped, tag = 'scratch operand']
  #allocation4 [shape = 'f32[8,8]{1,0:T(8,128)}', space=vmem, size = 0x1000, scoped, tag = 'scratch operand']
  %s0 = inlined_call_operand.vmem [shape: bf16[2,8,32], index: 0, kind: input, shape index: {}]
  %s1 = inlined_call_operand.vmem [shape: bf16[4,32,8], index: 1, kind: input, shape index: {}]
  %s2 = inlined_call_operand.vmem [shape: bf16[4,32,8], index: 2, kind: input, shape index: {}]
  %s3 = inlined_call_operand.vmem [shape: bf16[4,32,8], index: 3, kind: input, shape index: {}]
  %s4 = inlined_call_operand.vmem [shape: f32[4,1,8], index: 4, kind: input, shape index: {}]
  %s5 = inlined_call_operand.vmem [shape: f32[4,1,8], index: 5, kind: input, shape index: {}]
  %s6 = inlined_call_operand.vmem [shape: f32[4,1,8], index: 6, kind: input, shape index: {}]
  %s7 = inlined_call_operand.vmem [shape: bf16[2,4,8,8], index: 7, kind: output, shape index: {0}]
  %s8 = inlined_call_operand.vmem [shape: bf16[2,4,8,8], index: 8, kind: output, shape index: {1}]
  %s9 = inlined_call_operand.vmem [shape: bf16[2,4,8,8], index: 9, kind: output, shape index: {2}]
  %10 = xla_tuple %s7, %s8, %s9
  %s11 = sld [smem:[#allocation0]]
  $region85: #{mhsa_forward.3} parent=0
    _
  %s13 = ssub.s32 1, %s11
  %s14 = scalar_select 0, %s13, %s11
  loop: start=0, step=1, limit=10
  $region2: #{mhsa_forward.3} parent=0 // loop_pre_header
    _
  $region3: #{mhsa_forward.3} parent=0 // loop_header
    %s16 = sphi 0, %s20
    %p17 = scmp.ge.s32.totalorder %s16, 10
    %s23 = sphi 0, %s49
    %s24 = sphi 0, %s45
    %s25 = sphi 0, %s41
    %s26 = sphi 0, %s37
    %s27 = sphi 0, %s23
    %s28 = sphi 0, %s24
    %s29 = sphi 0, %s25
    %s30 = sphi 0, %s26
    %s31 = sphi 0, %s27
    %s32 = sphi 0, %s28
    %s33 = sphi 0, %s29
    %s34 = sphi 0, %s30
    %s56 = sphi 0, %s58
    %s59 = sphi 0, %s56
    %s60 = sphi 0, %s59
    %s76 = sphi 0, %s60
    %s84 = sphi 0, %s86
    %s87 = sphi 0, %s84
    %s88 = sphi 0, %s87
    %s104 = sphi 0, %s88
    %s112 = sphi 0, %s114
    %s115 = sphi 0, %s112
    %s116 = sphi 0, %s115
    %s132 = sphi 0, %s116
    %s140 = sphi 0, %s142
    %s143 = sphi 0, %s140
    %s144 = sphi 0, %s143
    %s160 = sphi 0, %s144
    %s166 = sphi 0, %s168
    %s169 = sphi 0, %s166
    %s170 = sphi 0, %s169
    %s186 = sphi 0, %s170
    %s192 = sphi 0, %s194
    %s195 = sphi 0, %s192
    %s196 = sphi 0, %s195
    %s212 = sphi 0, %s196
    %s218 = sphi 0, %s220
    %s221 = sphi 0, %s218
    %s222 = sphi 0, %s221
    %s238 = sphi 0, %s222
    %s248 = sphi 0, %s250
    %s251 = sphi 0, %s248
    %s252 = sphi 0, %s251
    %s268 = sphi 0, %s252
    %s278 = sphi 0, %s280
    %s281 = sphi 0, %s278
    %s282 = sphi 0, %s281
    %s298 = sphi 0, %s282
    %s308 = sphi 0, %s310
    %s311 = sphi 0, %s308
    %s312 = sphi 0, %s311
    %s328 = sphi 0, %s312
  $region4: #{mhsa_forward.3} parent=0 // loop_header_branch
    %19 = sbr.rel (%p17) target = $region8
  $region5: #{mhsa_forward.3} parent=0 // loop_body
    %s21 = ssub.s32 %s16, 1
    %s22 = ssub.s32 %s16, 2
    %s35 = sadd.s32 1, %s26
    %p36 = scmp.ge.s32.totalorder %s35, 1
    %s37 = scalar_select %p36, 0, %s35
    %s38 = sadd.s32 1, %s25
    %s39 = scalar_select %p36, %s38, %s25
    %p40 = scmp.ge.s32.totalorder %s39, 1
    %s41 = scalar_select %p40, 0, %s39
    %s42 = sadd.s32 1, %s24
    %s43 = scalar_select %p40, %s42, %s24
    %p44 = scmp.ge.s32.totalorder %s43, 4
    %s45 = scalar_select %p44, 0, %s43
    %s46 = sadd.s32 1, %s23
    %s47 = scalar_select %p44, %s46, %s23
    %p48 = scmp.ge.s32.totalorder %s47, 2
    %s49 = scalar_select %p48, 0, %s47
    %s50 = ssub.s32 %s23, %s49
    %s51 = ssub.s32 %s25, %s41
    %s52 = sor.u32 %s50, %s51
    %s53 = ssub.s32 %s26, %s37
    %s54 = sor.u32 %s52, %s53
    %p55 = scmp.eq.s32.totalorder %s54, 0
    %s57 = sadd.s32 %s56, 1
    %s58 = scalar_select %p55, %s56, %s57
    %p61 = pneg %p55
    %p62 = scmp.eq.s32.totalorder %s16, 7
    %p63 = por %p61, %p62
    %p64 = scmp.ne.s32.totalorder %s56, %s59
    %p65 = scmp.eq.s32.totalorder %s16, 0
    %p66 = por %p64, %p65
    %p67 = scmp.ne.s32.totalorder %s56, %s59
    %p68 = scmp.eq.s32.totalorder %s21, 7
    %p69 = por %p67, %p68
    %p70 = scmp.ne.s32.totalorder %s59, %s60
    %p71 = scmp.eq.s32.totalorder %s21, 0
    %p72 = por %p70, %p71
    %p73 = scmp.ne.s32.totalorder %s59, %s60
    %p74 = scmp.eq.s32.totalorder %s22, 7
    %p75 = por %p73, %p74
    %p77 = scmp.ne.s32.totalorder %s60, %s76
    %p78 = scmp.eq.s32.totalorder %s22, 0
    %p79 = por %p77, %p78
    %s80 = ssub.s32 %s24, %s45
    %s81 = ssub.s32 %s26, %s37
    %s82 = sor.u32 %s80, %s81
    %p83 = scmp.eq.s32.totalorder %s82, 0
    %s85 = sadd.s32 %s84, 1
    %s86 = scalar_select %p83, %s84, %s85
    %p89 = pneg %p83
    %p90 = scmp.eq.s32.totalorder %s16, 7
    %p91 = por %p89, %p90
    %p92 = scmp.ne.s32.totalorder %s84, %s87
    %p93 = scmp.eq.s32.totalorder %s16, 0
    %p94 = por %p92, %p93
    %p95 = scmp.ne.s32.totalorder %s84, %s87
    %p96 = scmp.eq.s32.totalorder %s21, 7
    %p97 = por %p95, %p96
    %p98 = scmp.ne.s32.totalorder %s87, %s88
    %p99 = scmp.eq.s32.totalorder %s21, 0
    %p100 = por %p98, %p99
    %p101 = scmp.ne.s32.totalorder %s87, %s88
    %p102 = scmp.eq.s32.totalorder %s22, 7
    %p103 = por %p101, %p102
    %p105 = scmp.ne.s32.totalorder %s88, %s104
    %p106 = scmp.eq.s32.totalorder %s22, 0
    %p107 = por %p105, %p106
    %s108 = ssub.s32 %s24, %s45
    %s109 = ssub.s32 %s26, %s37
    %s110 = sor.u32 %s108, %s109
    %p111 = scmp.eq.s32.totalorder %s110, 0
    %s113 = sadd.s32 %s112, 1
    %s114 = scalar_select %p111, %s112, %s113
    %p117 = pneg %p111
    %p118 = scmp.eq.s32.totalorder %s16, 7
    %p119 = por %p117, %p118
    %p120 = scmp.ne.s32.totalorder %s112, %s115
    %p121 = scmp.eq.s32.totalorder %s16, 0
    %p122 = por %p120, %p121
    %p123 = scmp.ne.s32.totalorder %s112, %s115
    %p124 = scmp.eq.s32.totalorder %s21, 7
    %p125 = por %p123, %p124
    %p126 = scmp.ne.s32.totalorder %s115, %s116
    %p127 = scmp.eq.s32.totalorder %s21, 0
    %p128 = por %p126, %p127
    %p129 = scmp.ne.s32.totalorder %s115, %s116
    %p130 = scmp.eq.s32.totalorder %s22, 7
    %p131 = por %p129, %p130
    %p133 = scmp.ne.s32.totalorder %s116, %s132
    %p134 = scmp.eq.s32.totalorder %s22, 0
    %p135 = por %p133, %p134
    %s136 = ssub.s32 %s24, %s45
    %s137 = ssub.s32 %s26, %s37
    %s138 = sor.u32 %s136, %s137
    %p139 = scmp.eq.s32.totalorder %s138, 0
    %s141 = sadd.s32 %s140, 1
    %s142 = scalar_select %p139, %s140, %s141
    %p145 = pneg %p139
    %p146 = scmp.eq.s32.totalorder %s16, 7
    %p147 = por %p145, %p146
    %p148 = scmp.ne.s32.totalorder %s140, %s143
    %p149 = scmp.eq.s32.totalorder %s16, 0
    %p150 = por %p148, %p149
    %p151 = scmp.ne.s32.totalorder %s140, %s143
    %p152 = scmp.eq.s32.totalorder %s21, 7
    %p153 = por %p151, %p152
    %p154 = scmp.ne.s32.totalorder %s143, %s144
    %p155 = scmp.eq.s32.totalorder %s21, 0
    %p156 = por %p154, %p155
    %p157 = scmp.ne.s32.totalorder %s143, %s144
    %p158 = scmp.eq.s32.totalorder %s22, 7
    %p159 = por %p157, %p158
    %p161 = scmp.ne.s32.totalorder %s144, %s160
    %p162 = scmp.eq.s32.totalorder %s22, 0
    %p163 = por %p161, %p162
    %s164 = ssub.s32 %s24, %s45
    %p165 = scmp.eq.s32.totalorder %s164, 0
    %s167 = sadd.s32 %s166, 1
    %s168 = scalar_select %p165, %s166, %s167
    %p171 = pneg %p165
    %p172 = scmp.eq.s32.totalorder %s16, 7
    %p173 = por %p171, %p172
    %p174 = scmp.ne.s32.totalorder %s166, %s169
    %p175 = scmp.eq.s32.totalorder %s16, 0
    %p176 = por %p174, %p175
    %p177 = scmp.ne.s32.totalorder %s166, %s169
    %p178 = scmp.eq.s32.totalorder %s21, 7
    %p179 = por %p177, %p178
    %p180 = scmp.ne.s32.totalorder %s169, %s170
    %p181 = scmp.eq.s32.totalorder %s21, 0
    %p182 = por %p180, %p181
    %p183 = scmp.ne.s32.totalorder %s169, %s170
    %p184 = scmp.eq.s32.totalorder %s22, 7
    %p185 = por %p183, %p184
    %p187 = scmp.ne.s32.totalorder %s170, %s186
    %p188 = scmp.eq.s32.totalorder %s22, 0
    %p189 = por %p187, %p188
    %s190 = ssub.s32 %s24, %s45
    %p191 = scmp.eq.s32.totalorder %s190, 0
    %s193 = sadd.s32 %s192, 1
    %s194 = scalar_select %p191, %s192, %s193
    %p197 = pneg %p191
    %p198 = scmp.eq.s32.totalorder %s16, 7
    %p199 = por %p197, %p198
    %p200 = scmp.ne.s32.totalorder %s192, %s195
    %p201 = scmp.eq.s32.totalorder %s16, 0
    %p202 = por %p200, %p201
    %p203 = scmp.ne.s32.totalorder %s192, %s195
    %p204 = scmp.eq.s32.totalorder %s21, 7
    %p205 = por %p203, %p204
    %p206 = scmp.ne.s32.totalorder %s195, %s196
    %p207 = scmp.eq.s32.totalorder %s21, 0
    %p208 = por %p206, %p207
    %p209 = scmp.ne.s32.totalorder %s195, %s196
    %p210 = scmp.eq.s32.totalorder %s22, 7
    %p211 = por %p209, %p210
    %p213 = scmp.ne.s32.totalorder %s196, %s212
    %p214 = scmp.eq.s32.totalorder %s22, 0
    %p215 = por %p213, %p214
    %s216 = ssub.s32 %s24, %s45
    %p217 = scmp.eq.s32.totalorder %s216, 0
    %s219 = sadd.s32 %s218, 1
    %s220 = scalar_select %p217, %s218, %s219
    %p223 = pneg %p217
    %p224 = scmp.eq.s32.totalorder %s16, 7
    %p225 = por %p223, %p224
    %p226 = scmp.ne.s32.totalorder %s218, %s221
    %p227 = scmp.eq.s32.totalorder %s16, 0
    %p228 = por %p226, %p227
    %p229 = scmp.ne.s32.totalorder %s218, %s221
    %p230 = scmp.eq.s32.totalorder %s21, 7
    %p231 = por %p229, %p230
    %p232 = scmp.ne.s32.totalorder %s221, %s222
    %p233 = scmp.eq.s32.totalorder %s21, 0
    %p234 = por %p232, %p233
    %p235 = scmp.ne.s32.totalorder %s221, %s222
    %p236 = scmp.eq.s32.totalorder %s22, 7
    %p237 = por %p235, %p236
    %p239 = scmp.ne.s32.totalorder %s222, %s238
    %p240 = scmp.eq.s32.totalorder %s22, 0
    %p241 = por %p239, %p240
    %s242 = ssub.s32 %s23, %s49
    %s243 = ssub.s32 %s24, %s45
    %s244 = sor.u32 %s242, %s243
    %s245 = ssub.s32 %s25, %s41
    %s246 = sor.u32 %s244, %s245
    %p247 = scmp.eq.s32.totalorder %s246, 0
    %s249 = sadd.s32 %s248, 1
    %s250 = scalar_select %p247, %s248, %s249
    %p253 = pneg %p247
    %p254 = scmp.eq.s32.totalorder %s16, 7
    %p255 = por %p253, %p254
    %p256 = scmp.ne.s32.totalorder %s248, %s251
    %p257 = scmp.eq.s32.totalorder %s16, 0
    %p258 = por %p256, %p257
    %p259 = scmp.ne.s32.totalorder %s248, %s251
    %p260 = scmp.eq.s32.totalorder %s21, 7
    %p261 = por %p259, %p260
    %p262 = scmp.ne.s32.totalorder %s251, %s252
    %p263 = scmp.eq.s32.totalorder %s21, 0
    %p264 = por %p262, %p263
    %p265 = scmp.ne.s32.totalorder %s251, %s252
    %p266 = scmp.eq.s32.totalorder %s22, 7
    %p267 = por %p265, %p266
    %p269 = scmp.ne.s32.totalorder %s252, %s268
    %p270 = scmp.eq.s32.totalorder %s22, 0
    %p271 = por %p269, %p270
    %s272 = ssub.s32 %s23, %s49
    %s273 = ssub.s32 %s24, %s45
    %s274 = sor.u32 %s272, %s273
    %s275 = ssub.s32 %s25, %s41
    %s276 = sor.u32 %s274, %s275
    %p277 = scmp.eq.s32.totalorder %s276, 0
    %s279 = sadd.s32 %s278, 1
    %s280 = scalar_select %p277, %s278, %s279
    %p283 = pneg %p277
    %p284 = scmp.eq.s32.totalorder %s16, 7
    %p285 = por %p283, %p284
    %p286 = scmp.ne.s32.totalorder %s278, %s281
    %p287 = scmp.eq.s32.totalorder %s16, 0
    %p288 = por %p286, %p287
    %p289 = scmp.ne.s32.totalorder %s278, %s281
    %p290 = scmp.eq.s32.totalorder %s21, 7
    %p291 = por %p289, %p290
    %p292 = scmp.ne.s32.totalorder %s281, %s282
    %p293 = scmp.eq.s32.totalorder %s21, 0
    %p294 = por %p292, %p293
    %p295 = scmp.ne.s32.totalorder %s281, %s282
    %p296 = scmp.eq.s32.totalorder %s22, 7
    %p297 = por %p295, %p296
    %p299 = scmp.ne.s32.totalorder %s282, %s298
    %p300 = scmp.eq.s32.totalorder %s22, 0
    %p301 = por %p299, %p300
    %s302 = ssub.s32 %s23, %s49
    %s303 = ssub.s32 %s24, %s45
    %s304 = sor.u32 %s302, %s303
    %s305 = ssub.s32 %s25, %s41
    %s306 = sor.u32 %s304, %s305
    %p307 = scmp.eq.s32.totalorder %s306, 0
    %s309 = sadd.s32 %s308, 1
    %s310 = scalar_select %p307, %s308, %s309
    %p313 = pneg %p307
    %p314 = scmp.eq.s32.totalorder %s16, 7
    %p315 = por %p313, %p314
    %p316 = scmp.ne.s32.totalorder %s308, %s311
    %p317 = scmp.eq.s32.totalorder %s16, 0
    %p318 = por %p316, %p317
    %p319 = scmp.ne.s32.totalorder %s308, %s311
    %p320 = scmp.eq.s32.totalorder %s21, 7
    %p321 = por %p319, %p320
    %p322 = scmp.ne.s32.totalorder %s311, %s312
    %p323 = scmp.eq.s32.totalorder %s21, 0
    %p324 = por %p322, %p323
    %p325 = scmp.ne.s32.totalorder %s311, %s312
    %p326 = scmp.eq.s32.totalorder %s22, 7
    %p327 = por %p325, %p326
    %p329 = scmp.ne.s32.totalorder %s312, %s328
    %p330 = scmp.eq.s32.totalorder %s22, 0
    %p331 = por %p329, %p330
    %p332 = scmp.le.s32.totalorder 1, %s16
    %p333 = scmp.lt.s32.totalorder %s16, 9
    %p334 = pnand %p332, %p333
    %p335 = pneg %p334
    // Predicated region
    $region9: #{mhsa_forward.3} parent=5 // pred_check
      _
    $region10: #{mhsa_forward.3} parent=5 // pred_check_branch
      %337 = sbr.rel (%p334) target = $region12
    $region11: #{mhsa_forward.3} parent=5 // pred_region
      %s338 = ssub.s32 %s16, 1
    $region12: #{mhsa_forward.3} parent=5 // pred_fallthru
      _
    %p339 = scmp.lt.s32.totalorder %s16, 8
    // Predicated region
    $region13: #{mhsa_forward.3} parent=5 // pred_check
      %p340 = pneg %p339
    $region14: #{mhsa_forward.3} parent=5 // pred_check_branch
      %342 = sbr.rel (%p340) target = $region16
    $region15: #{mhsa_forward.3} parent=5 // pred_region
      // Predicated region
      $region17: #{mhsa_forward.3} parent=15 // pred_check
        %p343 = pneg %p66
      $region18: #{mhsa_forward.3} parent=15 // pred_check_branch
        %345 = sbr.rel (%p343) target = $region20
      $region19: #{mhsa_forward.3} parent=15 // pred_region
        %p346 = scmp.lt.s32.totalorder %s23, 1
        %s347 = scalar_select %p346, %s23, 1
        %p348 = scmp.lt.s32.totalorder %s25, 0
        %s349 = scalar_select %p348, %s25, 0
        %p350 = scmp.lt.s32.totalorder %s26, 0
        %s351 = scalar_select %p350, %s26, 0
        %s352 = sadd.s32 %s351, %s349
        %s353 = sadd.s32 %s352, %s347
        %s354 = smul.addr %s353, 4
        %s355 = scalar_lea.vmem %s0, %s354
      $region20: #{mhsa_forward.3} parent=15 // pred_fallthru
        _
      // Predicated region
      $region21: #{mhsa_forward.3} parent=15 // pred_check
        %p356 = pneg %p94
      $region22: #{mhsa_forward.3} parent=15 // pred_check_branch
        %358 = sbr.rel (%p356) target = $region24
      $region23: #{mhsa_forward.3} parent=15 // pred_region
        %s359 = smul.u32 4, %s26
        %p360 = scmp.lt.s32.totalorder %s24, 3
        %s361 = scalar_select %p360, %s24, 3
        %p362 = scmp.lt.s32.totalorder %s359, 3
        %s363 = scalar_select %p362, %s359, 3
        %s364 = smul.addr %s361, 4
        %s365 = sadd.s32 %s363, %s364
        %s366 = smul.addr %s365, 4
        %s367 = scalar_lea.vmem %s1, %s366
        %s368 = smul.u32 4, %s26
      $region24: #{mhsa_forward.3} parent=15 // pred_fallthru
        _
      // Predicated region
      $region25: #{mhsa_forward.3} parent=15 // pred_check
        %p369 = pneg %p122
      $region26: #{mhsa_forward.3} parent=15 // pred_check_branch
        %371 = sbr.rel (%p369) target = $region28
      $region27: #{mhsa_forward.3} parent=15 // pred_region
        %s372 = smul.u32 4, %s26
        %p373 = scmp.lt.s32.totalorder %s24, 3
        %s374 = scalar_select %p373, %s24, 3
        %p375 = scmp.lt.s32.totalorder %s372, 3
        %s376 = scalar_select %p375, %s372, 3
        %s377 = smul.addr %s374, 4
        %s378 = sadd.s32 %s376, %s377
        %s379 = smul.addr %s378, 4
        %s380 = scalar_lea.vmem %s2, %s379
        %s381 = smul.u32 4, %s26
      $region28: #{mhsa_forward.3} parent=15 // pred_fallthru
        _
      // Predicated region
      $region29: #{mhsa_forward.3} parent=15 // pred_check
        %p382 = pneg %p150
      $region30: #{mhsa_forward.3} parent=15 // pred_check_branch
        %384 = sbr.rel (%p382) target = $region32
      $region31: #{mhsa_forward.3} parent=15 // pred_region
        %s385 = smul.u32 4, %s26
        %p386 = scmp.lt.s32.totalorder %s24, 3
        %s387 = scalar_select %p386, %s24, 3
        %p388 = scmp.lt.s32.totalorder %s385, 3
        %s389 = scalar_select %p388, %s385, 3
        %s390 = smul.addr %s387, 4
        %s391 = sadd.s32 %s389, %s390
        %s392 = smul.addr %s391, 4
        %s393 = scalar_lea.vmem %s3, %s392
        %s394 = smul.u32 4, %s26
      $region32: #{mhsa_forward.3} parent=15 // pred_fallthru
        _
      // Predicated region
      $region33: #{mhsa_forward.3} parent=15 // pred_check
        %p395 = pneg %p176
      $region34: #{mhsa_forward.3} parent=15 // pred_check_branch
        %397 = sbr.rel (%p395) target = $region36
      $region35: #{mhsa_forward.3} parent=15 // pred_region
        %p398 = scmp.lt.s32.totalorder %s24, 3
        %s399 = scalar_select %p398, %s24, 3
        %s400 = scalar_lea.vmem %s4, %s399
      $region36: #{mhsa_forward.3} parent=15 // pred_fallthru
        _
      // Predicated region
      $region37: #{mhsa_forward.3} parent=15 // pred_check
        %p401 = pneg %p202
      $region38: #{mhsa_forward.3} parent=15 // pred_check_branch
        %403 = sbr.rel (%p401) target = $region40
      $region39: #{mhsa_forward.3} parent=15 // pred_region
        %p404 = scmp.lt.s32.totalorder %s24, 3
        %s405 = scalar_select %p404, %s24, 3
        %s406 = scalar_lea.vmem %s5, %s405
      $region40: #{mhsa_forward.3} parent=15 // pred_fallthru
        _
      // Predicated region
      $region41: #{mhsa_forward.3} parent=15 // pred_check
        %p407 = pneg %p228
      $region42: #{mhsa_forward.3} parent=15 // pred_check_branch
        %409 = sbr.rel (%p407) target = $region44
      $region43: #{mhsa_forward.3} parent=15 // pred_region
        %p410 = scmp.lt.s32.totalorder %s24, 3
        %s411 = scalar_select %p410, %s24, 3
        %s412 = scalar_lea.vmem %s6, %s411
      $region44: #{mhsa_forward.3} parent=15 // pred_fallthru
        _
    $region16: #{mhsa_forward.3} parent=5 // pred_fallthru
      _
    %p413 = scmp.le.s32.totalorder 1, %s16
    %p414 = scmp.lt.s32.totalorder %s16, 9
    %p415 = pnand %p413, %p414
    %p416 = pneg %p415
    // Predicated region
    $region45: #{mhsa_forward.3} parent=5 // pred_check
      _
    $region46: #{mhsa_forward.3} parent=5 // pred_check_branch
      %418 = sbr.rel (%p415) target = $region48
    $region47: #{mhsa_forward.3} parent=5 // pred_region
      %s419 = ssub.s32 %s16, 1
      %p420 = scmp.lt.s32.totalorder %s27, 1
      %s421 = scalar_select %p420, %s27, 1
      %p422 = scmp.lt.s32.totalorder %s29, 0
      %s423 = scalar_select %p422, %s29, 0
      %p424 = scmp.lt.s32.totalorder %s30, 0
      %s425 = scalar_select %p424, %s30, 0
      %s426 = sadd.s32 %s425, %s423
      %s427 = sadd.s32 %s426, %s421
      %s428 = smul.addr %s427, 4
      %s429 = scalar_lea.vmem %s0, %s428
      %p430 = pneg %p72
      %p431 = pneg %p69
      %s432 = smul.u32 4, %s30
      %p433 = scmp.lt.s32.totalorder %s28, 3
      %s434 = scalar_select %p433, %s28, 3
      %p435 = scmp.lt.s32.totalorder %s432, 3
      %s436 = scalar_select %p435, %s432, 3
      %s437 = smul.addr %s434, 4
      %s438 = sadd.s32 %s436, %s437
      %s439 = smul.addr %s438, 4
      %s440 = scalar_lea.vmem %s1, %s439
      %p441 = pneg %p100
      %p442 = pneg %p97
      %s443 = smul.u32 4, %s30
      %p444 = scmp.lt.s32.totalorder %s28, 3
      %s445 = scalar_select %p444, %s28, 3
      %p446 = scmp.lt.s32.totalorder %s443, 3
      %s447 = scalar_select %p446, %s443, 3
      %s448 = smul.addr %s445, 4
      %s449 = sadd.s32 %s447, %s448
      %s450 = smul.addr %s449, 4
      %s451 = scalar_lea.vmem %s2, %s450
      %p452 = pneg %p128
      %p453 = pneg %p125
      %s454 = smul.u32 4, %s30
      %p455 = scmp.lt.s32.totalorder %s28, 3
      %s456 = scalar_select %p455, %s28, 3
      %p457 = scmp.lt.s32.totalorder %s454, 3
      %s458 = scalar_select %p457, %s454, 3
      %s459 = smul.addr %s456, 4
      %s460 = sadd.s32 %s458, %s459
      %s461 = smul.addr %s460, 4
      %s462 = scalar_lea.vmem %s3, %s461
      %p463 = pneg %p156
      %p464 = pneg %p153
      %p465 = scmp.lt.s32.totalorder %s28, 3
      %s466 = scalar_select %p465, %s28, 3
      %s467 = scalar_lea.vmem %s4, %s466
      %p468 = pneg %p182
      %p469 = pneg %p179
      %p470 = scmp.lt.s32.totalorder %s28, 3
      %s471 = scalar_select %p470, %s28, 3
      %s472 = scalar_lea.vmem %s5, %s471
      %p473 = pneg %p208
      %p474 = pneg %p205
      %p475 = scmp.lt.s32.totalorder %s28, 3
      %s476 = scalar_select %p475, %s28, 3
      %s477 = scalar_lea.vmem %s6, %s476
      %p478 = pneg %p234
      %p479 = pneg %p231
      %p480 = pneg %p264
      %p481 = pneg %p261
      %p482 = scmp.lt.s32.totalorder %s27, 1
      %s483 = scalar_select %p482, %s27, 1
      %p484 = scmp.lt.s32.totalorder %s28, 3
      %s485 = scalar_select %p484, %s28, 3
      %p486 = scmp.lt.s32.totalorder %s29, 0
      %s487 = scalar_select %p486, %s29, 0
      %s488 = sadd.s32 %s487, %s485
      %s489 = smul.addr %s483, 4
      %s490 = sadd.s32 %s488, %s489
      %s491 = smul.addr %s490, 4
      %s492 = scalar_lea.vmem %s7, %s491
      %p493 = pneg %p294
      %p494 = pneg %p291
      %p495 = scmp.lt.s32.totalorder %s27, 1
      %s496 = scalar_select %p495, %s27, 1
      %p497 = scmp.lt.s32.totalorder %s28, 3
      %s498 = scalar_select %p497, %s28, 3
      %p499 = scmp.lt.s32.totalorder %s29, 0
      %s500 = scalar_select %p499, %s29, 0
      %s501 = sadd.s32 %s500, %s498
      %s502 = smul.addr %s496, 4
      %s503 = sadd.s32 %s501, %s502
      %s504 = smul.addr %s503, 4
      %s505 = scalar_lea.vmem %s8, %s504
      %p506 = pneg %p324
      %p507 = pneg %p321
      %p508 = scmp.lt.s32.totalorder %s27, 1
      %s509 = scalar_select %p508, %s27, 1
      %p510 = scmp.lt.s32.totalorder %s28, 3
      %s511 = scalar_select %p510, %s28, 3
      %p512 = scmp.lt.s32.totalorder %s29, 0
      %s513 = scalar_select %p512, %s29, 0
      %s514 = sadd.s32 %s513, %s511
      %s515 = smul.addr %s509, 4
      %s516 = sadd.s32 %s514, %s515
      %s517 = smul.addr %s516, 4
      %s518 = scalar_lea.vmem %s9, %s517
      %p519 = scmp.lt.s32.totalorder %s27, 1
      %s520 = scalar_select %p519, %s27, 1
      %p521 = scmp.lt.s32.totalorder %s29, 0
      %s522 = scalar_select %p521, %s29, 0
      %p523 = scmp.lt.s32.totalorder %s30, 0
      %s524 = scalar_select %p523, %s30, 0
      %s525 = sadd.s32 %s524, %s522
      %s526 = sadd.s32 %s525, %s520
      %s527 = smul.addr %s526, 4
      %s528 = scalar_lea.vmem %s0, %s527
      %s529 = smul.u32 4, %s30
      %p530 = scmp.lt.s32.totalorder %s28, 3
      %s531 = scalar_select %p530, %s28, 3
      %p532 = scmp.lt.s32.totalorder %s529, 3
      %s533 = scalar_select %p532, %s529, 3
      %s534 = smul.addr %s531, 4
      %s535 = sadd.s32 %s533, %s534
      %s536 = smul.addr %s535, 4
      %s537 = scalar_lea.vmem %s1, %s536
      %s538 = smul.u32 4, %s30
      %s539 = smul.u32 4, %s30
      %p540 = scmp.lt.s32.totalorder %s28, 3
      %s541 = scalar_select %p540, %s28, 3
      %p542 = scmp.lt.s32.totalorder %s539, 3
      %s543 = scalar_select %p542, %s539, 3
      %s544 = smul.addr %s541, 4
      %s545 = sadd.s32 %s543, %s544
      %s546 = smul.addr %s545, 4
      %s547 = scalar_lea.vmem %s2, %s546
      %s548 = smul.u32 4, %s30
      %s549 = smul.u32 4, %s30
      %p550 = scmp.lt.s32.totalorder %s28, 3
      %s551 = scalar_select %p550, %s28, 3
      %p552 = scmp.lt.s32.totalorder %s549, 3
      %s553 = scalar_select %p552, %s549, 3
      %s554 = smul.addr %s551, 4
      %s555 = sadd.s32 %s553, %s554
      %s556 = smul.addr %s555, 4
      %s557 = scalar_lea.vmem %s3, %s556
      %s558 = smul.u32 4, %s30
      %p559 = scmp.lt.s32.totalorder %s28, 3
      %s560 = scalar_select %p559, %s28, 3
      %s561 = scalar_lea.vmem %s4, %s560
      %p562 = scmp.lt.s32.totalorder %s28, 3
      %s563 = scalar_select %p562, %s28, 3
      %s564 = scalar_lea.vmem %s5, %s563
      %p565 = scmp.lt.s32.totalorder %s28, 3
      %s566 = scalar_select %p565, %s28, 3
      %s567 = scalar_lea.vmem %s6, %s566
      %p568 = scmp.lt.s32.totalorder %s27, 1
      %s569 = scalar_select %p568, %s27, 1
      %p570 = scmp.lt.s32.totalorder %s28, 3
      %s571 = scalar_select %p570, %s28, 3
      %p572 = scmp.lt.s32.totalorder %s29, 0
      %s573 = scalar_select %p572, %s29, 0
      %s574 = sadd.s32 %s573, %s571
      %s575 = smul.addr %s569, 4
      %s576 = sadd.s32 %s574, %s575
      %s577 = smul.addr %s576, 4
      %s578 = scalar_lea.vmem %s7, %s577
      %p579 = scmp.lt.s32.totalorder %s27, 1
      %s580 = scalar_select %p579, %s27, 1
      %p581 = scmp.lt.s32.totalorder %s28, 3
      %s582 = scalar_select %p581, %s28, 3
      %p583 = scmp.lt.s32.totalorder %s29, 0
      %s584 = scalar_select %p583, %s29, 0
      %s585 = sadd.s32 %s584, %s582
      %s586 = smul.addr %s580, 4
      %s587 = sadd.s32 %s585, %s586
      %s588 = smul.addr %s587, 4
      %s589 = scalar_lea.vmem %s8, %s588
      %p590 = scmp.lt.s32.totalorder %s27, 1
      %s591 = scalar_select %p590, %s27, 1
      %p592 = scmp.lt.s32.totalorder %s28, 3
      %s593 = scalar_select %p592, %s28, 3
      %p594 = scmp.lt.s32.totalorder %s29, 0
      %s595 = scalar_select %p594, %s29, 0
      %s596 = sadd.s32 %s595, %s593
      %s597 = smul.addr %s591, 4
      %s598 = sadd.s32 %s596, %s597
      %s599 = smul.addr %s598, 4
      %s600 = scalar_lea.vmem %s9, %s599
      %p602 = scmp.eq.s32.totalorder %s30, 0
      // Predicated region
      $region49: #{mhsa_forward.3} parent=47 // pred_check
        %p603 = pneg %p602
      $region50: #{mhsa_forward.3} parent=47 // pred_check_branch
        %605 = sbr.rel (%p603) target = $region52
      $region51: #{mhsa_forward.3} parent=47 // pred_region
        %vm606 = vcmask 64512
        %607 = vst.msk [vmem:[#allocation2] sm:$0xff] %vm606, 0.0
        %608 = vst.msk [vmem:[#allocation3] sm:$0xff] %vm606, 0.0
        %609 = vst.msk [vmem:[#allocation4] sm:$0xff] %vm606, 0.0
      $region52: #{mhsa_forward.3} parent=47 // pred_fallthru
        _
      %v610 = vld [vmem:[%s528] sm:$0xf]
      %v611 = vld [vmem:[#allocation2] sm:$0xff]
      %v612 = vld [vmem:[%s537] sm:$0xf]
      %v613 = vld [vmem:[%s537 + $0x4] sm:$0xf]
      %v614 = vld [vmem:[%s537 + $0x8] sm:$0xf]
      %v615 = vld [vmem:[%s537 + $0xc] sm:$0xf]
      %v620 = vunpack.c.l.b16 %v612
      %v621 = vunpack.c.l.b16 %v613
      %v622 = vunpack.c.l.b16 %v614
      %v623 = vunpack.c.l.b16 %v615
      %v624 = vpack.c.b16 %v621, %v620
      %v625 = vpack.c.b16 %v623, %v622
      %vm628 = vcmask 261120
      %v630 = vsel %vm628, %v610, 0
      %632 = vmatprep.subr.bf16.mxu0 0
      %633 = vmatpush1.bf16.msra.mxu0 %v624
      %634 = vmatprep.subr.bf16.mxu0 0
      %635 = vmatpush1.bf16.msra.mxu0 %v625
      %636 = vmatprep.subr.bf16.mxu0 0
      %637 = vmatpush1.bf16.msra.mxu0 0
      %638 = vmatprep.subr.bf16.mxu0 0
      %639 = vmatpush1.bf16.msra.mxu0 0
      %640 = vmatprep.subr.bf16.mxu0 0
      %641 = vmatpush1.bf16.msra.mxu0 0
      %642 = vmatprep.subr.bf16.mxu0 0
      %643 = vmatpush1.bf16.msra.mxu0 0
      %644 = vmatprep.subr.bf16.mxu0 0
      %645 = vmatpush1.bf16.msra.mxu0 0
      %646 = vmatprep.subr.bf16.mxu0 0
      %647 = vmatpush1.bf16.msra.mxu0 0
      %648 = vmatprep.subr.bf16.mxu0 0
      %649 = vmatpush1.bf16.msra.mxu0 0
      %650 = vmatprep.subr.bf16.mxu0 0
      %651 = vmatpush1.bf16.msra.mxu0 0
      %652 = vmatprep.subr.bf16.mxu0 0
      %653 = vmatpush1.bf16.msra.mxu0 0
      %654 = vmatprep.subr.bf16.mxu0 0
      %655 = vmatpush1.bf16.msra.mxu0 0
      %656 = vmatprep.subr.bf16.mxu0 0
      %657 = vmatpush1.bf16.msra.mxu0 0
      %658 = vmatprep.subr.bf16.mxu0 0
      %659 = vmatpush1.bf16.msra.mxu0 0
      %660 = vmatprep.subr.bf16.mxu0 0
      %661 = vmatpush1.bf16.msra.mxu0 0
      %662 = vmatprep.subr.bf16.mxu0 0
      %663 = vmatpush1.bf16.msra.mxu0 0
      %664 = vmatprep.mubr.bf16.mxu0 0
      %665 = vmatmul.mubr.bf16.gmra.mrb[0].mxu0 %v630
      %v666 = vpop.f32.mrb[0].mxu0
      %v667 = vadd.f32 0.0, %v666
      %v668 = vpop.f32.mrb[0].mxu0
      %v669 = vpop.f32.mrb[0].mxu0
      %v670 = vpop.f32.mrb[0].mxu0
      %671 = vdwg.mxu0
      %v672 = vadd.f32 %v611, %v667
      %vm673 = vcmask 64512
      %674 = vst.msk [vmem:[#allocation2] sm:$0xff] %vm673, %v672
      %v675 = vld [vmem:[#allocation3] sm:$0xff]
      %v676 = vld [vmem:[%s547] sm:$0xf]
      %v677 = vld [vmem:[%s547 + $0x4] sm:$0xf]
      %v678 = vld [vmem:[%s547 + $0x8] sm:$0xf]
      %v679 = vld [vmem:[%s547 + $0xc] sm:$0xf]
      %v684 = vunpack.c.l.b16 %v676
      %v685 = vunpack.c.l.b16 %v677
      %v686 = vunpack.c.l.b16 %v678
      %v687 = vunpack.c.l.b16 %v679
      %v688 = vpack.c.b16 %v685, %v684
      %v689 = vpack.c.b16 %v687, %v686
      %692 = vmatprep.subr.bf16.mxu0 0
      %693 = vmatpush1.bf16.msra.mxu0 %v688
      %694 = vmatprep.subr.bf16.mxu0 0
      %695 = vmatpush1.bf16.msra.mxu0 %v689
      %696 = vmatprep.subr.bf16.mxu0 0
      %697 = vmatpush1.bf16.msra.mxu0 0
      %698 = vmatprep.subr.bf16.mxu0 0
      %699 = vmatpush1.bf16.msra.mxu0 0
      %700 = vmatprep.subr.bf16.mxu0 0
      %701 = vmatpush1.bf16.msra.mxu0 0
      %702 = vmatprep.subr.bf16.mxu0 0
      %703 = vmatpush1.bf16.msra.mxu0 0
      %704 = vmatprep.subr.bf16.mxu0 0
      %705 = vmatpush1.bf16.msra.mxu0 0
      %706 = vmatprep.subr.bf16.mxu0 0
      %707 = vmatpush1.bf16.msra.mxu0 0
      %708 = vmatprep.subr.bf16.mxu0 0
      %709 = vmatpush1.bf16.msra.mxu0 0
      %710 = vmatprep.subr.bf16.mxu0 0
      %711 = vmatpush1.bf16.msra.mxu0 0
      %712 = vmatprep.subr.bf16.mxu0 0
      %713 = vmatpush1.bf16.msra.mxu0 0
      %714 = vmatprep.subr.bf16.mxu0 0
      %715 = vmatpush1.bf16.msra.mxu0 0
      %716 = vmatprep.subr.bf16.mxu0 0
      %717 = vmatpush1.bf16.msra.mxu0 0
      %718 = vmatprep.subr.bf16.mxu0 0
      %719 = vmatpush1.bf16.msra.mxu0 0
      %720 = vmatprep.subr.bf16.mxu0 0
      %721 = vmatpush1.bf16.msra.mxu0 0
      %722 = vmatprep.subr.bf16.mxu0 0
      %723 = vmatpush1.bf16.msra.mxu0 0
      %724 = vmatprep.mubr.bf16.mxu0 0
      %725 = vmatmul.mubr.bf16.gmra.mrb[0].mxu0 %v630
      %v726 = vpop.f32.mrb[0].mxu0
      %v727 = vadd.f32 0.0, %v726
      %v728 = vpop.f32.mrb[0].mxu0
      %v729 = vpop.f32.mrb[0].mxu0
      %v730 = vpop.f32.mrb[0].mxu0
      %731 = vdwg.mxu0
      %v732 = vadd.f32 %v675, %v727
      %733 = vst.msk [vmem:[#allocation3] sm:$0xff] %vm673, %v732
      %v734 = vld [vmem:[#allocation4] sm:$0xff]
      %v735 = vld [vmem:[%s557] sm:$0xf]
      %v736 = vld [vmem:[%s557 + $0x4] sm:$0xf]
      %v737 = vld [vmem:[%s557 + $0x8] sm:$0xf]
      %v738 = vld [vmem:[%s557 + $0xc] sm:$0xf]
      %v743 = vunpack.c.l.b16 %v735
      %v744 = vunpack.c.l.b16 %v736
      %v745 = vunpack.c.l.b16 %v737
      %v746 = vunpack.c.l.b16 %v738
      %v747 = vpack.c.b16 %v744, %v743
      %v748 = vpack.c.b16 %v746, %v745
      %751 = vmatprep.subr.bf16.mxu0 0
      %752 = vmatpush1.bf16.msra.mxu0 %v747
      %753 = vmatprep.subr.bf16.mxu0 0
      %754 = vmatpush1.bf16.msra.mxu0 %v748
      %755 = vmatprep.subr.bf16.mxu0 0
      %756 = vmatpush1.bf16.msra.mxu0 0
      %757 = vmatprep.subr.bf16.mxu0 0
      %758 = vmatpush1.bf16.msra.mxu0 0
      %759 = vmatprep.subr.bf16.mxu0 0
      %760 = vmatpush1.bf16.msra.mxu0 0
      %761 = vmatprep.subr.bf16.mxu0 0
      %762 = vmatpush1.bf16.msra.mxu0 0
      %763 = vmatprep.subr.bf16.mxu0 0
      %764 = vmatpush1.bf16.msra.mxu0 0
      %765 = vmatprep.subr.bf16.mxu0 0
      %766 = vmatpush1.bf16.msra.mxu0 0
      %767 = vmatprep.subr.bf16.mxu0 0
      %768 = vmatpush1.bf16.msra.mxu0 0
      %769 = vmatprep.subr.bf16.mxu0 0
      %770 = vmatpush1.bf16.msra.mxu0 0
      %771 = vmatprep.subr.bf16.mxu0 0
      %772 = vmatpush1.bf16.msra.mxu0 0
      %773 = vmatprep.subr.bf16.mxu0 0
      %774 = vmatpush1.bf16.msra.mxu0 0
      %775 = vmatprep.subr.bf16.mxu0 0
      %776 = vmatpush1.bf16.msra.mxu0 0
      %777 = vmatprep.subr.bf16.mxu0 0
      %778 = vmatpush1.bf16.msra.mxu0 0
      %779 = vmatprep.subr.bf16.mxu0 0
      %780 = vmatpush1.bf16.msra.mxu0 0
      %781 = vmatprep.subr.bf16.mxu0 0
      %782 = vmatpush1.bf16.msra.mxu0 0
      %783 = vmatprep.mubr.bf16.mxu0 0
      %784 = vmatmul.mubr.bf16.gmra.mrb[0].mxu0 %v630
      %v785 = vpop.f32.mrb[0].mxu0
      %v786 = vadd.f32 0.0, %v785
      %v787 = vpop.f32.mrb[0].mxu0
      %v788 = vpop.f32.mrb[0].mxu0
      %v789 = vpop.f32.mrb[0].mxu0
      %790 = vdwg.mxu0
      %v791 = vadd.f32 %v734, %v786
      %792 = vst.msk [vmem:[#allocation4] sm:$0xff] %vm673, %v791
      // Predicated region
      $region53: #{mhsa_forward.3} parent=47 // pred_check
        %p793 = pneg %p602
      $region54: #{mhsa_forward.3} parent=47 // pred_check_branch
        %795 = sbr.rel (%p793) target = $region56
      $region55: #{mhsa_forward.3} parent=47 // pred_region
        %v796 = vld [vmem:[#allocation2] sm:$0xff]
        %v797 = vld [vmem:[%s561] sm:$0x1]
        %v799 = vlaneseq
        %v800 = vshrl.u32 %v799, 7
        %v801 = vsub.s32 0, %v800
        %v802 = vrot.slane %v797, %v801
        %v804 = vadd.f32 %v796, %v802
        %v805 = vpack.c.bf16 %v804, %v804
        %vm806 = vcmask 60416
        %807 = vst.msk [vmem:[%s578] sm:$0xf] %vm806, %v805
        %v808 = vld [vmem:[#allocation3] sm:$0xff]
        %v809 = vld [vmem:[%s564] sm:$0x1]
        %v811 = vlaneseq
        %v812 = vshrl.u32 %v811, 7
        %v813 = vsub.s32 0, %v812
        %v814 = vrot.slane %v809, %v813
        %v816 = vadd.f32 %v808, %v814
        %v817 = vpack.c.bf16 %v816, %v816
        %818 = vst.msk [vmem:[%s589] sm:$0xf] %vm806, %v817
        %v819 = vld [vmem:[#allocation4] sm:$0xff]
        %v820 = vld [vmem:[%s567] sm:$0x1]
        %v822 = vlaneseq
        %v823 = vshrl.u32 %v822, 7
        %v824 = vsub.s32 0, %v823
        %v825 = vrot.slane %v820, %v824
        %v827 = vadd.f32 %v819, %v825
        %v828 = vpack.c.bf16 %v827, %v827
        %829 = vst.msk [vmem:[%s600] sm:$0xf] %vm806, %v828
      $region56: #{mhsa_forward.3} parent=47 // pred_fallthru
        _
      %p830 = scmp.lt.s32.totalorder %s27, 1
      %s831 = scalar_select %p830, %s27, 1
      %p832 = scmp.lt.s32.totalorder %s28, 3
      %s833 = scalar_select %p832, %s28, 3
      %p834 = scmp.lt.s32.totalorder %s29, 0
      %s835 = scalar_select %p834, %s29, 0
      %s836 = sadd.s32 %s835, %s833
      %s837 = smul.addr %s831, 4
      %s838 = sadd.s32 %s836, %s837
      %s839 = smul.addr %s838, 4
      %s840 = scalar_lea.vmem %s7, %s839
      %p841 = scmp.lt.s32.totalorder %s27, 1
      %s842 = scalar_select %p841, %s27, 1
      %p843 = scmp.lt.s32.totalorder %s28, 3
      %s844 = scalar_select %p843, %s28, 3
      %p845 = scmp.lt.s32.totalorder %s29, 0
      %s846 = scalar_select %p845, %s29, 0
      %s847 = sadd.s32 %s846, %s844
      %s848 = smul.addr %s842, 4
      %s849 = sadd.s32 %s847, %s848
      %s850 = smul.addr %s849, 4
      %s851 = scalar_lea.vmem %s8, %s850
      %p852 = scmp.lt.s32.totalorder %s27, 1
      %s853 = scalar_select %p852, %s27, 1
      %p854 = scmp.lt.s32.totalorder %s28, 3
      %s855 = scalar_select %p854, %s28, 3
      %p856 = scmp.lt.s32.totalorder %s29, 0
      %s857 = scalar_select %p856, %s29, 0
      %s858 = sadd.s32 %s857, %s855
      %s859 = smul.addr %s853, 4
      %s860 = sadd.s32 %s858, %s859
      %s861 = smul.addr %s860, 4
      %s862 = scalar_lea.vmem %s9, %s861
      // Predicated region
      $region57: #{mhsa_forward.3} parent=47 // pred_check
        %p863 = pneg %p261
      $region58: #{mhsa_forward.3} parent=47 // pred_check_branch
        %865 = sbr.rel (%p863) target = $region60
      $region59: #{mhsa_forward.3} parent=47 // pred_region
        _
      $region60: #{mhsa_forward.3} parent=47 // pred_fallthru
        _
      // Predicated region
      $region61: #{mhsa_forward.3} parent=47 // pred_check
        %p866 = pneg %p291
      $region62: #{mhsa_forward.3} parent=47 // pred_check_branch
        %868 = sbr.rel (%p866) target = $region64
      $region63: #{mhsa_forward.3} parent=47 // pred_region
        _
      $region64: #{mhsa_forward.3} parent=47 // pred_fallthru
        _
      // Predicated region
      $region65: #{mhsa_forward.3} parent=47 // pred_check
        %p869 = pneg %p321
      $region66: #{mhsa_forward.3} parent=47 // pred_check_branch
        %871 = sbr.rel (%p869) target = $region68
      $region67: #{mhsa_forward.3} parent=47 // pred_region
        _
      $region68: #{mhsa_forward.3} parent=47 // pred_fallthru
        _
    $region48: #{mhsa_forward.3} parent=5 // pred_fallthru
      _
    %p872 = scmp.le.s32.totalorder 2, %s16
    // Predicated region
    $region69: #{mhsa_forward.3} parent=5 // pred_check
      %p873 = pneg %p872
    $region70: #{mhsa_forward.3} parent=5 // pred_check_branch
      %875 = sbr.rel (%p873) target = $region72
    $region71: #{mhsa_forward.3} parent=5 // pred_region
      %s876 = ssub.s32 %s16, 2
      // Predicated region
      $region73: #{mhsa_forward.3} parent=71 // pred_check
        %p877 = pneg %p267
      $region74: #{mhsa_forward.3} parent=71 // pred_check_branch
        %879 = sbr.rel (%p877) target = $region76
      $region75: #{mhsa_forward.3} parent=71 // pred_region
        %p880 = scmp.lt.s32.totalorder %s31, 1
        %s881 = scalar_select %p880, %s31, 1
        %p882 = scmp.lt.s32.totalorder %s32, 3
        %s883 = scalar_select %p882, %s32, 3
        %p884 = scmp.lt.s32.totalorder %s33, 0
        %s885 = scalar_select %p884, %s33, 0
        %s886 = sadd.s32 %s885, %s883
        %s887 = smul.addr %s881, 4
        %s888 = sadd.s32 %s886, %s887
        %s889 = smul.addr %s888, 4
        %s890 = scalar_lea.vmem %s7, %s889
      $region76: #{mhsa_forward.3} parent=71 // pred_fallthru
        _
      // Predicated region
      $region77: #{mhsa_forward.3} parent=71 // pred_check
        %p891 = pneg %p297
      $region78: #{mhsa_forward.3} parent=71 // pred_check_branch
        %893 = sbr.rel (%p891) target = $region80
      $region79: #{mhsa_forward.3} parent=71 // pred_region
        %p894 = scmp.lt.s32.totalorder %s31, 1
        %s895 = scalar_select %p894, %s31, 1
        %p896 = scmp.lt.s32.totalorder %s32, 3
        %s897 = scalar_select %p896, %s32, 3
        %p898 = scmp.lt.s32.totalorder %s33, 0
        %s899 = scalar_select %p898, %s33, 0
        %s900 = sadd.s32 %s899, %s897
        %s901 = smul.addr %s895, 4
        %s902 = sadd.s32 %s900, %s901
        %s903 = smul.addr %s902, 4
        %s904 = scalar_lea.vmem %s8, %s903
      $region80: #{mhsa_forward.3} parent=71 // pred_fallthru
        _
      // Predicated region
      $region81: #{mhsa_forward.3} parent=71 // pred_check
        %p905 = pneg %p327
      $region82: #{mhsa_forward.3} parent=71 // pred_check_branch
        %907 = sbr.rel (%p905) target = $region84
      $region83: #{mhsa_forward.3} parent=71 // pred_region
        %p908 = scmp.lt.s32.totalorder %s31, 1
        %s909 = scalar_select %p908, %s31, 1
        %p910 = scmp.lt.s32.totalorder %s32, 3
        %s911 = scalar_select %p910, %s32, 3
        %p912 = scmp.lt.s32.totalorder %s33, 0
        %s913 = scalar_select %p912, %s33, 0
        %s914 = sadd.s32 %s913, %s911
        %s915 = smul.addr %s909, 4
        %s916 = sadd.s32 %s914, %s915
        %s917 = smul.addr %s916, 4
        %s918 = scalar_lea.vmem %s9, %s917
      $region84: #{mhsa_forward.3} parent=71 // pred_fallthru
        _
    $region72: #{mhsa_forward.3} parent=5 // pred_fallthru
      _
  $region6: #{mhsa_forward.3} parent=0 // loop_footer
    %s20 = sadd.s32 1, %s16
  $region7: #{mhsa_forward.3} parent=0 // loop_footer_branch
    %15 = sbr.rel target = $region3
  $region8: #{mhsa_forward.3} parent=0 // loop_exit
    _

// kernel: mhsa_forward.4
$region0: #{mhsa_forward.4}
  #allocation0 [shape = 'u32[]', space=smem, size = 0x4, offset = 0x4, fixed_abs, tag = 'smem constant byte address 0x4 - core index']
  #allocation1 [shape = 'u32[144,128]{1,0:T(1,128)}', space=vmem, size = 0x12000, scoped, tag = 'internal scratch']
  #allocation2 [shape = 'f32[8,1]{1,0:T(8,128)}', space=vmem, size = 0x1000, scoped, tag = 'scratch operand']
  #allocation3 [shape = 'f32[8,1]{1,0:T(8,128)}', space=vmem, size = 0x1000, scoped, tag = 'scratch operand']
  #allocation4 [shape = 'f32[8,8]{1,0:T(8,128)}', space=vmem, size = 0x1000, scoped, tag = 'scratch operand']
  %s0 = inlined_call_operand.vmem [shape: bf16[2,4,8,8], index: 0, kind: input, shape index: {}]
  %s1 = inlined_call_operand.vmem [shape: bf16[2,4,8,8], index: 1, kind: input, shape index: {}]
  %s2 = inlined_call_operand.vmem [shape: bf16[2,4,8,8], index: 2, kind: input, shape index: {}]
  %s3 = inlined_call_operand.vmem [shape: bf16[2,4,8,8], index: 3, kind: output, shape index: {}]
  %s4 = sld [smem:[#allocation0]]
  $region53: #{mhsa_forward.4} parent=0
    _
  %s6 = ssub.s32 1, %s4
  %s7 = scalar_select 0, %s6, %s4
  loop: start=0, step=1, limit=10
  $region2: #{mhsa_forward.4} parent=0 // loop_pre_header
    _
  $region3: #{mhsa_forward.4} parent=0 // loop_header
    %s9 = sphi 0, %s13
    %p10 = scmp.ge.s32.totalorder %s9, 10
    %s16 = sphi 0, %s42
    %s17 = sphi 0, %s38
    %s18 = sphi 0, %s34
    %s19 = sphi 0, %s30
    %s20 = sphi 0, %s16
    %s21 = sphi 0, %s17
    %s22 = sphi 0, %s18
    %s23 = sphi 0, %s19
    %s24 = sphi 0, %s20
    %s25 = sphi 0, %s21
    %s26 = sphi 0, %s22
    %s27 = sphi 0, %s23
    %s49 = sphi 0, %s51
    %s52 = sphi 0, %s49
    %s53 = sphi 0, %s52
    %s69 = sphi 0, %s53
    %s79 = sphi 0, %s81
    %s82 = sphi 0, %s79
    %s83 = sphi 0, %s82
    %s99 = sphi 0, %s83
    %s109 = sphi 0, %s111
    %s112 = sphi 0, %s109
    %s113 = sphi 0, %s112
    %s129 = sphi 0, %s113
    %s139 = sphi 0, %s141
    %s142 = sphi 0, %s139
    %s143 = sphi 0, %s142
    %s159 = sphi 0, %s143
  $region4: #{mhsa_forward.4} parent=0 // loop_header_branch
    %12 = sbr.rel (%p10) target = $region8
  $region5: #{mhsa_forward.4} parent=0 // loop_body
    %s14 = ssub.s32 %s9, 1
    %s15 = ssub.s32 %s9, 2
    %s28 = sadd.s32 1, %s19
    %p29 = scmp.ge.s32.totalorder %s28, 1
    %s30 = scalar_select %p29, 0, %s28
    %s31 = sadd.s32 1, %s18
    %s32 = scalar_select %p29, %s31, %s18
    %p33 = scmp.ge.s32.totalorder %s32, 1
    %s34 = scalar_select %p33, 0, %s32
    %s35 = sadd.s32 1, %s17
    %s36 = scalar_select %p33, %s35, %s17
    %p37 = scmp.ge.s32.totalorder %s36, 4
    %s38 = scalar_select %p37, 0, %s36
    %s39 = sadd.s32 1, %s16
    %s40 = scalar_select %p37, %s39, %s16
    %p41 = scmp.ge.s32.totalorder %s40, 2
    %s42 = scalar_select %p41, 0, %s40
    %s43 = ssub.s32 %s16, %s42
    %s44 = ssub.s32 %s17, %s38
    %s45 = sor.u32 %s43, %s44
    %s46 = ssub.s32 %s18, %s34
    %s47 = sor.u32 %s45, %s46
    %p48 = scmp.eq.s32.totalorder %s47, 0
    %s50 = sadd.s32 %s49, 1
    %s51 = scalar_select %p48, %s49, %s50
    %p54 = pneg %p48
    %p55 = scmp.eq.s32.totalorder %s9, 7
    %p56 = por %p54, %p55
    %p57 = scmp.ne.s32.totalorder %s49, %s52
    %p58 = scmp.eq.s32.totalorder %s9, 0
    %p59 = por %p57, %p58
    %p60 = scmp.ne.s32.totalorder %s49, %s52
    %p61 = scmp.eq.s32.totalorder %s14, 7
    %p62 = por %p60, %p61
    %p63 = scmp.ne.s32.totalorder %s52, %s53
    %p64 = scmp.eq.s32.totalorder %s14, 0
    %p65 = por %p63, %p64
    %p66 = scmp.ne.s32.totalorder %s52, %s53
    %p67 = scmp.eq.s32.totalorder %s15, 7
    %p68 = por %p66, %p67
    %p70 = scmp.ne.s32.totalorder %s53, %s69
    %p71 = scmp.eq.s32.totalorder %s15, 0
    %p72 = por %p70, %p71
    %s73 = ssub.s32 %s16, %s42
    %s74 = ssub.s32 %s17, %s38
    %s75 = sor.u32 %s73, %s74
    %s76 = ssub.s32 %s19, %s30
    %s77 = sor.u32 %s75, %s76
    %p78 = scmp.eq.s32.totalorder %s77, 0
    %s80 = sadd.s32 %s79, 1
    %s81 = scalar_select %p78, %s79, %s80
    %p84 = pneg %p78
    %p85 = scmp.eq.s32.totalorder %s9, 7
    %p86 = por %p84, %p85
    %p87 = scmp.ne.s32.totalorder %s79, %s82
    %p88 = scmp.eq.s32.totalorder %s9, 0
    %p89 = por %p87, %p88
    %p90 = scmp.ne.s32.totalorder %s79, %s82
    %p91 = scmp.eq.s32.totalorder %s14, 7
    %p92 = por %p90, %p91
    %p93 = scmp.ne.s32.totalorder %s82, %s83
    %p94 = scmp.eq.s32.totalorder %s14, 0
    %p95 = por %p93, %p94
    %p96 = scmp.ne.s32.totalorder %s82, %s83
    %p97 = scmp.eq.s32.totalorder %s15, 7
    %p98 = por %p96, %p97
    %p100 = scmp.ne.s32.totalorder %s83, %s99
    %p101 = scmp.eq.s32.totalorder %s15, 0
    %p102 = por %p100, %p101
    %s103 = ssub.s32 %s16, %s42
    %s104 = ssub.s32 %s17, %s38
    %s105 = sor.u32 %s103, %s104
    %s106 = ssub.s32 %s19, %s30
    %s107 = sor.u32 %s105, %s106
    %p108 = scmp.eq.s32.totalorder %s107, 0
    %s110 = sadd.s32 %s109, 1
    %s111 = scalar_select %p108, %s109, %s110
    %p114 = pneg %p108
    %p115 = scmp.eq.s32.totalorder %s9, 7
    %p116 = por %p114, %p115
    %p117 = scmp.ne.s32.totalorder %s109, %s112
    %p118 = scmp.eq.s32.totalorder %s9, 0
    %p119 = por %p117, %p118
    %p120 = scmp.ne.s32.totalorder %s109, %s112
    %p121 = scmp.eq.s32.totalorder %s14, 7
    %p122 = por %p120, %p121
    %p123 = scmp.ne.s32.totalorder %s112, %s113
    %p124 = scmp.eq.s32.totalorder %s14, 0
    %p125 = por %p123, %p124
    %p126 = scmp.ne.s32.totalorder %s112, %s113
    %p127 = scmp.eq.s32.totalorder %s15, 7
    %p128 = por %p126, %p127
    %p130 = scmp.ne.s32.totalorder %s113, %s129
    %p131 = scmp.eq.s32.totalorder %s15, 0
    %p132 = por %p130, %p131
    %s133 = ssub.s32 %s16, %s42
    %s134 = ssub.s32 %s17, %s38
    %s135 = sor.u32 %s133, %s134
    %s136 = ssub.s32 %s18, %s34
    %s137 = sor.u32 %s135, %s136
    %p138 = scmp.eq.s32.totalorder %s137, 0
    %s140 = sadd.s32 %s139, 1
    %s141 = scalar_select %p138, %s139, %s140
    %p144 = pneg %p138
    %p145 = scmp.eq.s32.totalorder %s9, 7
    %p146 = por %p144, %p145
    %p147 = scmp.ne.s32.totalorder %s139, %s142
    %p148 = scmp.eq.s32.totalorder %s9, 0
    %p149 = por %p147, %p148
    %p150 = scmp.ne.s32.totalorder %s139, %s142
    %p151 = scmp.eq.s32.totalorder %s14, 7
    %p152 = por %p150, %p151
    %p153 = scmp.ne.s32.totalorder %s142, %s143
    %p154 = scmp.eq.s32.totalorder %s14, 0
    %p155 = por %p153, %p154
    %p156 = scmp.ne.s32.totalorder %s142, %s143
    %p157 = scmp.eq.s32.totalorder %s15, 7
    %p158 = por %p156, %p157
    %p160 = scmp.ne.s32.totalorder %s143, %s159
    %p161 = scmp.eq.s32.totalorder %s15, 0
    %p162 = por %p160, %p161
    %p163 = scmp.le.s32.totalorder 1, %s9
    %p164 = scmp.lt.s32.totalorder %s9, 9
    %p165 = pnand %p163, %p164
    %p166 = pneg %p165
    // Predicated region
    $region9: #{mhsa_forward.4} parent=5 // pred_check
      _
    $region10: #{mhsa_forward.4} parent=5 // pred_check_branch
      %168 = sbr.rel (%p165) target = $region12
    $region11: #{mhsa_forward.4} parent=5 // pred_region
      %s169 = ssub.s32 %s9, 1
    $region12: #{mhsa_forward.4} parent=5 // pred_fallthru
      _
    %p170 = scmp.lt.s32.totalorder %s9, 8
    // Predicated region
    $region13: #{mhsa_forward.4} parent=5 // pred_check
      %p171 = pneg %p170
    $region14: #{mhsa_forward.4} parent=5 // pred_check_branch
      %173 = sbr.rel (%p171) target = $region16
    $region15: #{mhsa_forward.4} parent=5 // pred_region
      // Predicated region
      $region17: #{mhsa_forward.4} parent=15 // pred_check
        %p174 = pneg %p59
      $region18: #{mhsa_forward.4} parent=15 // pred_check_branch
        %176 = sbr.rel (%p174) target = $region20
      $region19: #{mhsa_forward.4} parent=15 // pred_region
        %p177 = scmp.lt.s32.totalorder %s16, 1
        %s178 = scalar_select %p177, %s16, 1
        %p179 = scmp.lt.s32.totalorder %s17, 3
        %s180 = scalar_select %p179, %s17, 3
        %p181 = scmp.lt.s32.totalorder %s18, 0
        %s182 = scalar_select %p181, %s18, 0
        %s183 = sadd.s32 %s182, %s180
        %s184 = smul.addr %s178, 4
        %s185 = sadd.s32 %s183, %s184
        %s186 = smul.addr %s185, 4
        %s187 = scalar_lea.vmem %s0, %s186
      $region20: #{mhsa_forward.4} parent=15 // pred_fallthru
        _
      // Predicated region
      $region21: #{mhsa_forward.4} parent=15 // pred_check
        %p188 = pneg %p89
      $region22: #{mhsa_forward.4} parent=15 // pred_check_branch
        %190 = sbr.rel (%p188) target = $region24
      $region23: #{mhsa_forward.4} parent=15 // pred_region
        %p191 = scmp.lt.s32.totalorder %s16, 1
        %s192 = scalar_select %p191, %s16, 1
        %p193 = scmp.lt.s32.totalorder %s17, 3
        %s194 = scalar_select %p193, %s17, 3
        %p195 = scmp.lt.s32.totalorder %s19, 0
        %s196 = scalar_select %p195, %s19, 0
        %s197 = sadd.s32 %s196, %s194
        %s198 = smul.addr %s192, 4
        %s199 = sadd.s32 %s197, %s198
        %s200 = smul.addr %s199, 4
        %s201 = scalar_lea.vmem %s1, %s200
      $region24: #{mhsa_forward.4} parent=15 // pred_fallthru
        _
      // Predicated region
      $region25: #{mhsa_forward.4} parent=15 // pred_check
        %p202 = pneg %p119
      $region26: #{mhsa_forward.4} parent=15 // pred_check_branch
        %204 = sbr.rel (%p202) target = $region28
      $region27: #{mhsa_forward.4} parent=15 // pred_region
        %p205 = scmp.lt.s32.totalorder %s16, 1
        %s206 = scalar_select %p205, %s16, 1
        %p207 = scmp.lt.s32.totalorder %s17, 3
        %s208 = scalar_select %p207, %s17, 3
        %p209 = scmp.lt.s32.totalorder %s19, 0
        %s210 = scalar_select %p209, %s19, 0
        %s211 = sadd.s32 %s210, %s208
        %s212 = smul.addr %s206, 4
        %s213 = sadd.s32 %s211, %s212
        %s214 = smul.addr %s213, 4
        %s215 = scalar_lea.vmem %s2, %s214
      $region28: #{mhsa_forward.4} parent=15 // pred_fallthru
        _
    $region16: #{mhsa_forward.4} parent=5 // pred_fallthru
      _
    %p216 = scmp.le.s32.totalorder 1, %s9
    %p217 = scmp.lt.s32.totalorder %s9, 9
    %p218 = pnand %p216, %p217
    %p219 = pneg %p218
    // Predicated region
    $region29: #{mhsa_forward.4} parent=5 // pred_check
      _
    $region30: #{mhsa_forward.4} parent=5 // pred_check_branch
      %221 = sbr.rel (%p218) target = $region32
    $region31: #{mhsa_forward.4} parent=5 // pred_region
      %s222 = ssub.s32 %s9, 1
      %p223 = scmp.lt.s32.totalorder %s20, 1
      %s224 = scalar_select %p223, %s20, 1
      %p225 = scmp.lt.s32.totalorder %s21, 3
      %s226 = scalar_select %p225, %s21, 3
      %p227 = scmp.lt.s32.totalorder %s22, 0
      %s228 = scalar_select %p227, %s22, 0
      %s229 = sadd.s32 %s228, %s226
      %s230 = smul.addr %s224, 4
      %s231 = sadd.s32 %s229, %s230
      %s232 = smul.addr %s231, 4
      %s233 = scalar_lea.vmem %s0, %s232
      %p234 = pneg %p65
      %p235 = pneg %p62
      %p236 = scmp.lt.s32.totalorder %s20, 1
      %s237 = scalar_select %p236, %s20, 1
      %p238 = scmp.lt.s32.totalorder %s21, 3
      %s239 = scalar_select %p238, %s21, 3
      %p240 = scmp.lt.s32.totalorder %s23, 0
      %s241 = scalar_select %p240, %s23, 0
      %s242 = sadd.s32 %s241, %s239
      %s243 = smul.addr %s237, 4
      %s244 = sadd.s32 %s242, %s243
      %s245 = smul.addr %s244, 4
      %s246 = scalar_lea.vmem %s1, %s245
      %p247 = pneg %p95
      %p248 = pneg %p92
      %p249 = scmp.lt.s32.totalorder %s20, 1
      %s250 = scalar_select %p249, %s20, 1
      %p251 = scmp.lt.s32.totalorder %s21, 3
      %s252 = scalar_select %p251, %s21, 3
      %p253 = scmp.lt.s32.totalorder %s23, 0
      %s254 = scalar_select %p253, %s23, 0
      %s255 = sadd.s32 %s254, %s252
      %s256 = smul.addr %s250, 4
      %s257 = sadd.s32 %s255, %s256
      %s258 = smul.addr %s257, 4
      %s259 = scalar_lea.vmem %s2, %s258
      %p260 = pneg %p125
      %p261 = pneg %p122
      %p262 = pneg %p155
      %p263 = pneg %p152
      %p264 = scmp.lt.s32.totalorder %s20, 1
      %s265 = scalar_select %p264, %s20, 1
      %p266 = scmp.lt.s32.totalorder %s21, 3
      %s267 = scalar_select %p266, %s21, 3
      %p268 = scmp.lt.s32.totalorder %s22, 0
      %s269 = scalar_select %p268, %s22, 0
      %s270 = sadd.s32 %s269, %s267
      %s271 = smul.addr %s265, 4
      %s272 = sadd.s32 %s270, %s271
      %s273 = smul.addr %s272, 4
      %s274 = scalar_lea.vmem %s3, %s273
      %p275 = scmp.lt.s32.totalorder %s20, 1
      %s276 = scalar_select %p275, %s20, 1
      %p277 = scmp.lt.s32.totalorder %s21, 3
      %s278 = scalar_select %p277, %s21, 3
      %p279 = scmp.lt.s32.totalorder %s22, 0
      %s280 = scalar_select %p279, %s22, 0
      %s281 = sadd.s32 %s280, %s278
      %s282 = smul.addr %s276, 4
      %s283 = sadd.s32 %s281, %s282
      %s284 = smul.addr %s283, 4
      %s285 = scalar_lea.vmem %s0, %s284
      %p286 = scmp.lt.s32.totalorder %s20, 1
      %s287 = scalar_select %p286, %s20, 1
      %p288 = scmp.lt.s32.totalorder %s21, 3
      %s289 = scalar_select %p288, %s21, 3
      %p290 = scmp.lt.s32.totalorder %s23, 0
      %s291 = scalar_select %p290, %s23, 0
      %s292 = sadd.s32 %s291, %s289
      %s293 = smul.addr %s287, 4
      %s294 = sadd.s32 %s292, %s293
      %s295 = smul.addr %s294, 4
      %s296 = scalar_lea.vmem %s1, %s295
      %p297 = scmp.lt.s32.totalorder %s20, 1
      %s298 = scalar_select %p297, %s20, 1
      %p299 = scmp.lt.s32.totalorder %s21, 3
      %s300 = scalar_select %p299, %s21, 3
      %p301 = scmp.lt.s32.totalorder %s23, 0
      %s302 = scalar_select %p301, %s23, 0
      %s303 = sadd.s32 %s302, %s300
      %s304 = smul.addr %s298, 4
      %s305 = sadd.s32 %s303, %s304
      %s306 = smul.addr %s305, 4
      %s307 = scalar_lea.vmem %s2, %s306
      %p308 = scmp.lt.s32.totalorder %s20, 1
      %s309 = scalar_select %p308, %s20, 1
      %p310 = scmp.lt.s32.totalorder %s21, 3
      %s311 = scalar_select %p310, %s21, 3
      %p312 = scmp.lt.s32.totalorder %s22, 0
      %s313 = scalar_select %p312, %s22, 0
      %s314 = sadd.s32 %s313, %s311
      %s315 = smul.addr %s309, 4
      %s316 = sadd.s32 %s314, %s315
      %s317 = smul.addr %s316, 4
      %s318 = scalar_lea.vmem %s3, %s317
      %p320 = scmp.eq.s32.totalorder %s23, 0
      // Predicated region
      $region33: #{mhsa_forward.4} parent=31 // pred_check
        %p321 = pneg %p320
      $region34: #{mhsa_forward.4} parent=31 // pred_check_branch
        %323 = sbr.rel (%p321) target = $region36
      $region35: #{mhsa_forward.4} parent=31 // pred_region
        %vm324 = vcmask 7168
        %325 = vst.msk [vmem:[#allocation2] sm:$0xff] %vm324, -inf
        %326 = vst.msk [vmem:[#allocation3] sm:$0xff] %vm324, 0.0
        %vm327 = vcmask 64512
        %328 = vst.msk [vmem:[#allocation4] sm:$0xff] %vm327, 0.0
      $region36: #{mhsa_forward.4} parent=31 // pred_fallthru
        _
      %v329 = vld [vmem:[%s285] sm:$0xf]
      %v330 = vld [vmem:[%s296] sm:$0xf]
      %v331 = vld [vmem:[%s307] sm:$0xf]
      %vm332 = vcmask 64512
      %v334 = vsel %vm332, %v329, 0
      %v337 = vsel %vm332, %v330, 0
      %339 = vmatprep.subr.bf16.mxu0 0
      %340 = vmatpush1.bf16.xpose.msra.mxu0 %v337
      %341 = vmatprep.subr.bf16.mxu0 0
      %342 = vmatpush1.bf16.xpose.msra.mxu0 0
      %343 = vmatprep.subr.bf16.mxu0 0
      %344 = vmatpush1.bf16.xpose.msra.mxu0 0
      %345 = vmatprep.subr.bf16.mxu0 0
      %346 = vmatpush1.bf16.xpose.msra.mxu0 0
      %347 = vmatprep.subr.bf16.mxu0 0
      %348 = vmatpush1.bf16.xpose.msra.mxu0 0
      %349 = vmatprep.subr.bf16.mxu0 0
      %350 = vmatpush1.bf16.xpose.msra.mxu0 0
      %351 = vmatprep.subr.bf16.mxu0 0
      %352 = vmatpush1.bf16.xpose.msra.mxu0 0
      %353 = vmatprep.subr.bf16.mxu0 0
      %354 = vmatpush1.bf16.xpose.msra.mxu0 0
      %355 = vmatprep.subr.bf16.mxu0 0
      %356 = vmatpush1.bf16.xpose.msra.mxu0 0
      %357 = vmatprep.subr.bf16.mxu0 0
      %358 = vmatpush1.bf16.xpose.msra.mxu0 0
      %359 = vmatprep.subr.bf16.mxu0 0
      %360 = vmatpush1.bf16.xpose.msra.mxu0 0
      %361 = vmatprep.subr.bf16.mxu0 0
      %362 = vmatpush1.bf16.xpose.msra.mxu0 0
      %363 = vmatprep.subr.bf16.mxu0 0
      %364 = vmatpush1.bf16.xpose.msra.mxu0 0
      %365 = vmatprep.subr.bf16.mxu0 0
      %366 = vmatpush1.bf16.xpose.msra.mxu0 0
      %367 = vmatprep.subr.bf16.mxu0 0
      %368 = vmatpush1.bf16.xpose.msra.mxu0 0
      %369 = vmatprep.subr.bf16.mxu0 0
      %370 = vmatpush1.bf16.xpose.msra.mxu0 0
      %371 = vmatprep.mubr.bf16.mxu0 0
      %372 = vmatmul.mubr.bf16.gmra.mrb[0].mxu0 %v334
      %v373 = vpop.f32.mrb[0].mxu0
      %v374 = vadd.f32 0.0, %v373
      %v375 = vpop.f32.mrb[0].mxu0
      %v376 = vpop.f32.mrb[0].mxu0
      %v377 = vpop.f32.mrb[0].mxu0
      %378 = vdwg.mxu0
      %v379 = vmul.f32 %v374, 0.35355338
      %v380 = vld [vmem:[#allocation2] sm:$0xff]
      %v381 = vsel %vm332, %v379, -inf
      %382 = vmax.xlane.f32.xlu0 %v381
      %v383 = vpop.xlane.xlu0 %382
      %v384 = vmax.f32 %v380, %v383
      %v385 = vsub.f32 %v380, %v384
      %v386 = vmul.f32 %v385, 1.442695
      %v387 = vpow.pop %v386
      %389 = vset.pattern.permute.xlu0 0
      %390 = vperm.xlu0 %389, %v384
      %v391 = vpop.permute.xlu0 %390
      %v393 = vsub.f32 %v379, %v391
      %v394 = vmul.f32 %v393, 1.442695
      %v395 = vpow.pop %v394
      %v396 = vld [vmem:[#allocation3] sm:$0xff]
      %v397 = vmul.f32 %v387, %v396
      %v398 = vsel %vm332, %v395, 0.0
      %399 = vadd.xlane.f32.xlu0 %v398
      %v400 = vpop.xlane.xlu0 %399
      %v401 = vadd.f32 %v397, %v400
      %vm402 = vcmask 7168
      %403 = vst.msk [vmem:[#allocation3] sm:$0xff] %vm402, %v401
      %v404 = vld [vmem:[#allocation4] sm:$0xff]
      %406 = vset.pattern.permute.xlu0 0
      %407 = vperm.xlu0 %406, %v387
      %v408 = vpop.permute.xlu0 %407
      %v410 = vmul.f32 %v408, %v404
      %v411 = vpack.c.bf16 %v395, %v395
      %v413 = vsel %vm332, %v411, 0
      %vm415 = vcmask 1043456
      %v417 = vsel %vm415, %v331, 0
      %419 = vmatprep.subr.bf16.mxu0 0
      %420 = vmatpush1.bf16.msra.mxu0 %v417
      %421 = vmatprep.subr.bf16.mxu0 0
      %422 = vmatpush1.bf16.msra.mxu0 0
      %423 = vmatprep.subr.bf16.mxu0 0
      %424 = vmatpush1.bf16.msra.mxu0 0
      %425 = vmatprep.subr.bf16.mxu0 0
      %426 = vmatpush1.bf16.msra.mxu0 0
      %427 = vmatprep.subr.bf16.mxu0 0
      %428 = vmatpush1.bf16.msra.mxu0 0
      %429 = vmatprep.subr.bf16.mxu0 0
      %430 = vmatpush1.bf16.msra.mxu0 0
      %431 = vmatprep.subr.bf16.mxu0 0
      %432 = vmatpush1.bf16.msra.mxu0 0
      %433 = vmatprep.subr.bf16.mxu0 0
      %434 = vmatpush1.bf16.msra.mxu0 0
      %435 = vmatprep.subr.bf16.mxu0 0
      %436 = vmatpush1.bf16.msra.mxu0 0
      %437 = vmatprep.subr.bf16.mxu0 0
      %438 = vmatpush1.bf16.msra.mxu0 0
      %439 = vmatprep.subr.bf16.mxu0 0
      %440 = vmatpush1.bf16.msra.mxu0 0
      %441 = vmatprep.subr.bf16.mxu0 0
      %442 = vmatpush1.bf16.msra.mxu0 0
      %443 = vmatprep.subr.bf16.mxu0 0
      %444 = vmatpush1.bf16.msra.mxu0 0
      %445 = vmatprep.subr.bf16.mxu0 0
      %446 = vmatpush1.bf16.msra.mxu0 0
      %447 = vmatprep.subr.bf16.mxu0 0
      %448 = vmatpush1.bf16.msra.mxu0 0
      %449 = vmatprep.subr.bf16.mxu0 0
      %450 = vmatpush1.bf16.msra.mxu0 0
      %451 = vmatprep.mubr.bf16.mxu0 0
      %452 = vmatmul.mubr.bf16.gmra.mrb[0].mxu0 %v413
      %v453 = vpop.f32.mrb[0].mxu0
      %v454 = vadd.f32 0.0, %v453
      %v455 = vpop.f32.mrb[0].mxu0
      %v456 = vpop.f32.mrb[0].mxu0
      %v457 = vpop.f32.mrb[0].mxu0
      %458 = vdwg.mxu0
      %v459 = vadd.f32 %v410, %v454
      %460 = vst.msk [vmem:[#allocation4] sm:$0xff] %vm332, %v459
      %461 = vst.msk [vmem:[#allocation2] sm:$0xff] %vm402, %v384
      // Predicated region
      $region37: #{mhsa_forward.4} parent=31 // pred_check
        %p462 = pneg %p320
      $region38: #{mhsa_forward.4} parent=31 // pred_check_branch
        %464 = sbr.rel (%p462) target = $region40
      $region39: #{mhsa_forward.4} parent=31 // pred_region
        %v465 = vld [vmem:[#allocation3] sm:$0xff]
        %v466 = vrcp.pop %v465
        %v467 = vld [vmem:[#allocation4] sm:$0xff]
        %469 = vset.pattern.permute.xlu0 0
        %470 = vperm.xlu0 %469, %v466
        %v471 = vpop.permute.xlu0 %470
        %v473 = vmul.f32 %v467, %v471
        %v474 = vpack.c.bf16 %v473, %v473
        %vm475 = vcmask 60416
        %476 = vst.msk [vmem:[%s318] sm:$0xf] %vm475, %v474
      $region40: #{mhsa_forward.4} parent=31 // pred_fallthru
        _
      %p477 = scmp.lt.s32.totalorder %s20, 1
      %s478 = scalar_select %p477, %s20, 1
      %p479 = scmp.lt.s32.totalorder %s21, 3
      %s480 = scalar_select %p479, %s21, 3
      %p481 = scmp.lt.s32.totalorder %s22, 0
      %s482 = scalar_select %p481, %s22, 0
      %s483 = sadd.s32 %s482, %s480
      %s484 = smul.addr %s478, 4
      %s485 = sadd.s32 %s483, %s484
      %s486 = smul.addr %s485, 4
      %s487 = scalar_lea.vmem %s3, %s486
      // Predicated region
      $region41: #{mhsa_forward.4} parent=31 // pred_check
        %p488 = pneg %p152
      $region42: #{mhsa_forward.4} parent=31 // pred_check_branch
        %490 = sbr.rel (%p488) target = $region44
      $region43: #{mhsa_forward.4} parent=31 // pred_region
        _
      $region44: #{mhsa_forward.4} parent=31 // pred_fallthru
        _
    $region32: #{mhsa_forward.4} parent=5 // pred_fallthru
      _
    %p491 = scmp.le.s32.totalorder 2, %s9
    // Predicated region
    $region45: #{mhsa_forward.4} parent=5 // pred_check
      %p492 = pneg %p491
    $region46: #{mhsa_forward.4} parent=5 // pred_check_branch
      %494 = sbr.rel (%p492) target = $region48
    $region47: #{mhsa_forward.4} parent=5 // pred_region
      %s495 = ssub.s32 %s9, 2
      // Predicated region
      $region49: #{mhsa_forward.4} parent=47 // pred_check
        %p496 = pneg %p158
      $region50: #{mhsa_forward.4} parent=47 // pred_check_branch
        %498 = sbr.rel (%p496) target = $region52
      $region51: #{mhsa_forward.4} parent=47 // pred_region
        %p499 = scmp.lt.s32.totalorder %s24, 1
        %s500 = scalar_select %p499, %s24, 1
        %p501 = scmp.lt.s32.totalorder %s25, 3
        %s502 = scalar_select %p501, %s25, 3
        %p503 = scmp.lt.s32.totalorder %s26, 0
        %s504 = scalar_select %p503, %s26, 0
        %s505 = sadd.s32 %s504, %s502
        %s506 = smul.addr %s500, 4
        %s507 = sadd.s32 %s505, %s506
        %s508 = smul.addr %s507, 4
        %s509 = scalar_lea.vmem %s3, %s508
      $region52: #{mhsa_forward.4} parent=47 // pred_fallthru
        _
    $region48: #{mhsa_forward.4} parent=5 // pred_fallthru
      _
  $region6: #{mhsa_forward.4} parent=0 // loop_footer
    %s13 = sadd.s32 1, %s9
  $region7: #{mhsa_forward.4} parent=0 // loop_footer_branch
    %8 = sbr.rel target = $region3
  $region8: #{mhsa_forward.4} parent=0 // loop_exit
    _

</llo_original>
